<compile_context>
chip_gen: v6e
topology: v6e:2x2x1
jax: 0.10.0
libtpu: 0.0.40
codegen_flags: <defaults>
</compile_context>

<pallas_src>
import jax
import jax.numpy as jnp
from jax.experimental import pallas as pl
from jax.experimental.pallas import tpu as pltpu


def _mm(a, b):
    # f32-exact matmul (pool weights are exact; keeps E within ~1e-6 of ref).
    return jnp.dot(a, b, preferred_element_type=jnp.float32,
                   precision=jax.lax.Precision.HIGHEST)


def spatial_loss_kernel(ph_ref, pwt_ref, org_ref, enh_ref, e_ref):
    # ph_ref:  (Hp, H)  avg-pool row matrix (entries 0 / 0.25), VMEM-resident
    # pwt_ref: (W, Wp)  avg-pool col matrix (already transposed), VMEM-resident
    # org_ref / enh_ref block: (Bt, C, H, W);  e_ref block: (Bt, 1, Hp, Wp)
    bt = org_ref.shape[0]
    hp, wp = e_ref.shape[2], e_ref.shape[3]

    ph = ph_ref[...]          # loaded once per grid step, reused for all images
    pwt = pwt_ref[...]

    # Edge masks implementing the conv2d zero padding of the shifted neighbour.
    # These are O(Hp*Wp) iota compares on the VPU — negligible (unlike the big
    # constant matrices the previous version rebuilt every step).
    row = jax.lax.broadcasted_iota(jnp.int32, (hp, wp), 0)
    col = jax.lax.broadcasted_iota(jnp.int32, (hp, wp), 1)
    first_row, last_row = row == 0, row == hp - 1
    first_col, last_col = col == 0, col == wp - 1

    def pool(x_chw):
        # torch.mean(x, 1) followed by nn.AvgPool2d(4):  Ph @ mean @ PwT
        m = jnp.mean(x_chw.astype(jnp.float32), axis=0)            # (H, W)
        return _mm(_mm(ph, m), pwt)                                # (Hp, Wp)

    def dconv(x):
        # x - zero-padded shifted neighbour == F.conv2d(x, kernel_*, padding=1)
        # Shifts go through the XLU (pltpu.roll); masks zero the wrapped edge.
        nb_l = jnp.where(first_col, 0.0, pltpu.roll(x, 1, 1))       # x[i, j-1]
        nb_r = jnp.where(last_col, 0.0, pltpu.roll(x, wp - 1, 1))   # x[i, j+1]
        nb_u = jnp.where(first_row, 0.0, pltpu.roll(x, 1, 0))       # x[i-1, j]
        nb_d = jnp.where(last_row, 0.0, pltpu.roll(x, hp - 1, 0))   # x[i+1, j]
        return x - nb_l, x - nb_r, x - nb_u, x - nb_d

    # Static unroll over the images sharing this grid step.
    for bi in range(bt):
        op = pool(org_ref[bi])
        ep = pool(enh_ref[bi])
        ol, orr, ou, od = dconv(op)
        el, er, eu, ed = dconv(ep)
        e_ref[bi, 0] = ((ol - el) ** 2 + (orr - er) ** 2
                        + (ou - eu) ** 2 + (od - ed) ** 2)


def spatial_loss(org, enhance, *, batch_block=1):
    """Pallas implementation of SpatialLoss.forward. Inputs NCHW (f32 or bf16)."""
    B, C, H, W = org.shape
    assert enhance.shape == org.shape
    assert H % 4 == 0 and W % 4 == 0, "AvgPool2d(4) path requires H, W % 4 == 0"
    assert B % batch_block == 0
    Hp, Wp = H // 4, W // 4

    # 4x4 average-pool matrices, built once outside the kernel (stay resident
    # in VMEM across the batch grid thanks to the constant index_map).
    ph = jnp.where(jnp.arange(H)[None, :] // 4 == jnp.arange(Hp)[:, None],
                   0.25, 0.0).astype(jnp.float32)                   # (Hp, H)
    pwt = jnp.where(jnp.arange(W)[:, None] // 4 == jnp.arange(Wp)[None, :],
                    0.25, 0.0).astype(jnp.float32)                  # (W, Wp)

    # Raise the scoped-VMEM limit only when the double-buffered blocks need it.
    itemsize = jnp.dtype(org.dtype).itemsize
    in_block_bytes = 2 * batch_block * C * H * W * itemsize          # org + enh
    est = (2 * in_block_bytes                                        # 2x buffered
           + 2 * batch_block * Hp * Wp * 4                           # output bufs
           + (Hp * H + W * Wp) * 4                                   # pool mats
           + (2 << 20))                                              # slack
    vmem_limit = int(min(est, 127 << 20)) if est > (32 << 20) else None

    return pl.pallas_call(
        spatial_loss_kernel,
        out_shape=jax.ShapeDtypeStruct((B, 1, Hp, Wp), jnp.float32),
        grid=(B // batch_block,),
        in_specs=[
            pl.BlockSpec((Hp, H), lambda b: (0, 0)),     # constant -> resident
            pl.BlockSpec((W, Wp), lambda b: (0, 0)),     # constant -> resident
            pl.BlockSpec((batch_block, C, H, W), lambda b: (b, 0, 0, 0)),
            pl.BlockSpec((batch_block, C, H, W), lambda b: (b, 0, 0, 0)),
        ],
        out_specs=pl.BlockSpec((batch_block, 1, Hp, Wp), lambda b: (b, 0, 0, 0)),
        compiler_params=pltpu.CompilerParams(
            dimension_semantics=("parallel",),
            vmem_limit_bytes=vmem_limit,
        ),
    )(ph, pwt, org, enhance)


def spatial_loss_reference(org, enhance):
    """Pure-JAX reference mirroring the PyTorch forward."""
    org_mean = jnp.mean(org, axis=1, keepdims=True)
    enh_mean = jnp.mean(enhance, axis=1, keepdims=True)

    def pool(x):
        B, _, H, W = x.shape
        return x.reshape(B, 1, H // 4, 4, W // 4, 4).mean(axis=(3, 5))

    op, ep = pool(org_mean), pool(enh_mean)

    def dirs(x):
        xp = jnp.pad(x, ((0, 0), (0, 0), (1, 1), (1, 1)))
        left = x - xp[:, :, 1:-1, 0:-2]
        right = x - xp[:, :, 1:-1, 2:]
        up = x - xp[:, :, 0:-2, 1:-1]
        down = x - xp[:, :, 2:, 1:-1]
        return left, right, up, down

    ol, orr, ou, od = dirs(op)
    el, err, eu, ed = dirs(ep)
    return ((ol - el) ** 2 + (orr - err) ** 2
            + (ou - eu) ** 2 + (od - ed) ** 2)


if __name__ == "__main__":
    key = jax.random.PRNGKey(0)
    k1, k2 = jax.random.split(key)
    B, C, H, W = 2, 4, 16, 16
    org = jax.random.uniform(k1, (B, C, H, W), dtype=jnp.float32)
    enhance = jax.random.uniform(k2, (B, C, H, W), dtype=jnp.float32)

    ref = spatial_loss_reference(org, enhance)

    # One image per grid step (default) ...
    out1 = jax.block_until_ready(spatial_loss(org, enhance))
    # ... and the amortized small-image path: both images in one grid step.
    out2 = jax.block_until_ready(spatial_loss(org, enhance, batch_block=2))

    assert out1.shape == (B, 1, H // 4, W // 4), out1.shape
    assert out2.shape == (B, 1, H // 4, W // 4), out2.shape
    if not jnp.allclose(out1, ref, atol=1e-5, rtol=1e-4):
        raise AssertionError("Pallas SpatialLoss (batch_block=1) != reference")
    if not jnp.allclose(out2, ref, atol=1e-5, rtol=1e-4):
        raise AssertionError("Pallas SpatialLoss (batch_block=2) != reference")

    print("KERNEL_OK")
</pallas_src>

<mosaic_0001>
module attributes {stable_mosaic.version = 11 : i64} {
  func.func @spatial_loss_kernel(%arg0: i32, %arg1: memref<4x16xf32, #tpu.memory_space<vmem>>, %arg2: memref<16x4xf32, #tpu.memory_space<vmem>>, %arg3: memref<1x4x16x16xf32, #tpu.memory_space<vmem>>, %arg4: memref<1x4x16x16xf32, #tpu.memory_space<vmem>>, %arg5: memref<1x1x4x4xf32, #tpu.memory_space<vmem>>) attributes {dimension_semantics = [#tpu.dimension_semantics<parallel>], iteration_bounds = array<i64: 2>, scalar_prefetch = 0 : i64, scratch_operands = 0 : i64, tpu.core_type = #tpu.core_type<tc>, window_params = [{pipeline_mode = #tpu.pipeline_mode<synchronous>, transform_indices = @transform_0, window_bounds = array<i64: 4, 16>}, {pipeline_mode = #tpu.pipeline_mode<synchronous>, transform_indices = @transform_1, window_bounds = array<i64: 16, 4>}, {transform_indices = @transform_2, window_bounds = array<i64: 1, 4, 16, 16>}, {transform_indices = @transform_3, window_bounds = array<i64: 1, 4, 16, 16>}, {transform_indices = @transform_4, window_bounds = array<i64: 1, 1, 4, 4>}]} {
    %c0 = arith.constant 0 : index
    %c0_0 = arith.constant 0 : index
    %0 = vector.load %arg1[%c0, %c0_0] : memref<4x16xf32, #tpu.memory_space<vmem>>, vector<4x16xf32>
    %c0_1 = arith.constant 0 : index
    %c0_2 = arith.constant 0 : index
    %1 = vector.load %arg2[%c0_1, %c0_2] : memref<16x4xf32, #tpu.memory_space<vmem>>, vector<16x4xf32>
    %2 = tpu.iota {dimensions = array<i32: 0>} : vector<4x4xi32>
    %3 = tpu.iota {dimensions = array<i32: 1>} : vector<4x4xi32>
    %c0_i32 = arith.constant 0 : i32
    %4 = vector.broadcast %c0_i32 : i32 to vector<4x4xi32>
    %5 = arith.cmpi eq, %2, %4 : vector<4x4xi32>
    %c3_i32 = arith.constant 3 : i32
    %6 = vector.broadcast %c3_i32 : i32 to vector<4x4xi32>
    %7 = arith.cmpi eq, %2, %6 : vector<4x4xi32>
    %c0_i32_3 = arith.constant 0 : i32
    %8 = vector.broadcast %c0_i32_3 : i32 to vector<4x4xi32>
    %9 = arith.cmpi eq, %3, %8 : vector<4x4xi32>
    %c3_i32_4 = arith.constant 3 : i32
    %10 = vector.broadcast %c3_i32_4 : i32 to vector<4x4xi32>
    %11 = arith.cmpi eq, %3, %10 : vector<4x4xi32>
    %c0_5 = arith.constant 0 : index
    %c0_6 = arith.constant 0 : index
    %c0_7 = arith.constant 0 : index
    %c0_8 = arith.constant 0 : index
    %12 = vector.load %arg3[%c0_5, %c0_6, %c0_7, %c0_8] : memref<1x4x16x16xf32, #tpu.memory_space<vmem>>, vector<1x4x16x16xf32>
    %13 = vector.shape_cast %12 : vector<1x4x16x16xf32> to vector<4x16x16xf32>
    %cst = arith.constant dense<0.000000e+00> : vector<16x16xf32>
    %14 = vector.multi_reduction <add>, %13, %cst [0] : vector<4x16x16xf32> to vector<16x16xf32>
    %cst_9 = arith.constant 4.000000e+00 : f32
    %15 = vector.broadcast %cst_9 : f32 to vector<16x16xf32>
    %16 = arith.divf %14, %15 : vector<16x16xf32>
    %cst_10 = arith.constant dense<0.000000e+00> : vector<4x16xf32>
    %17 = tpu.matmul %0, %16, %cst_10 {dimension_numbers = #tpu.dot_dimension_numbers<[1], [0], [0], [1], [0, 0, 1, 1], [], []>, precision = #tpu.contract_precision<fp32>} : vector<4x16xf32>, vector<16x16xf32>, vector<4x16xf32> -> vector<4x16xf32>
    %cst_11 = arith.constant dense<0.000000e+00> : vector<4x4xf32>
    %18 = tpu.matmul %17, %1, %cst_11 {dimension_numbers = #tpu.dot_dimension_numbers<[1], [0], [0], [1], [0, 0, 1, 1], [], []>, precision = #tpu.contract_precision<fp32>} : vector<4x16xf32>, vector<16x4xf32>, vector<4x4xf32> -> vector<4x4xf32>
    %c0_12 = arith.constant 0 : index
    %c0_13 = arith.constant 0 : index
    %c0_14 = arith.constant 0 : index
    %c0_15 = arith.constant 0 : index
    %19 = vector.load %arg4[%c0_12, %c0_13, %c0_14, %c0_15] : memref<1x4x16x16xf32, #tpu.memory_space<vmem>>, vector<1x4x16x16xf32>
    %20 = vector.shape_cast %19 : vector<1x4x16x16xf32> to vector<4x16x16xf32>
    %cst_16 = arith.constant dense<0.000000e+00> : vector<16x16xf32>
    %21 = vector.multi_reduction <add>, %20, %cst_16 [0] : vector<4x16x16xf32> to vector<16x16xf32>
    %cst_17 = arith.constant 4.000000e+00 : f32
    %22 = vector.broadcast %cst_17 : f32 to vector<16x16xf32>
    %23 = arith.divf %21, %22 : vector<16x16xf32>
    %cst_18 = arith.constant dense<0.000000e+00> : vector<4x16xf32>
    %24 = tpu.matmul %0, %23, %cst_18 {dimension_numbers = #tpu.dot_dimension_numbers<[1], [0], [0], [1], [0, 0, 1, 1], [], []>, precision = #tpu.contract_precision<fp32>} : vector<4x16xf32>, vector<16x16xf32>, vector<4x16xf32> -> vector<4x16xf32>
    %cst_19 = arith.constant dense<0.000000e+00> : vector<4x4xf32>
    %25 = tpu.matmul %24, %1, %cst_19 {dimension_numbers = #tpu.dot_dimension_numbers<[1], [0], [0], [1], [0, 0, 1, 1], [], []>, precision = #tpu.contract_precision<fp32>} : vector<4x16xf32>, vector<16x4xf32>, vector<4x4xf32> -> vector<4x4xf32>
    %c1_i32 = arith.constant 1 : i32
    %26 = tpu.dynamic_rotate %18 by %c1_i32 dim 1 : vector<4x4xf32>, i32 -> vector<4x4xf32>
    %cst_20 = arith.constant 0.000000e+00 : f32
    %27 = vector.broadcast %cst_20 : f32 to vector<4x4xf32>
    %28 = arith.select %9, %27, %26 : vector<4x4xi1>, vector<4x4xf32>
    %c3_i32_21 = arith.constant 3 : i32
    %29 = tpu.dynamic_rotate %18 by %c3_i32_21 dim 1 : vector<4x4xf32>, i32 -> vector<4x4xf32>
    %cst_22 = arith.constant 0.000000e+00 : f32
    %30 = vector.broadcast %cst_22 : f32 to vector<4x4xf32>
    %31 = arith.select %11, %30, %29 : vector<4x4xi1>, vector<4x4xf32>
    %c1_i32_23 = arith.constant 1 : i32
    %32 = tpu.dynamic_rotate %18 by %c1_i32_23 dim 0 : vector<4x4xf32>, i32 -> vector<4x4xf32>
    %cst_24 = arith.constant 0.000000e+00 : f32
    %33 = vector.broadcast %cst_24 : f32 to vector<4x4xf32>
    %34 = arith.select %5, %33, %32 : vector<4x4xi1>, vector<4x4xf32>
    %c3_i32_25 = arith.constant 3 : i32
    %35 = tpu.dynamic_rotate %18 by %c3_i32_25 dim 0 : vector<4x4xf32>, i32 -> vector<4x4xf32>
    %cst_26 = arith.constant 0.000000e+00 : f32
    %36 = vector.broadcast %cst_26 : f32 to vector<4x4xf32>
    %37 = arith.select %7, %36, %35 : vector<4x4xi1>, vector<4x4xf32>
    %38 = arith.subf %18, %28 : vector<4x4xf32>
    %39 = arith.subf %18, %31 : vector<4x4xf32>
    %40 = arith.subf %18, %34 : vector<4x4xf32>
    %41 = arith.subf %18, %37 : vector<4x4xf32>
    %c1_i32_27 = arith.constant 1 : i32
    %42 = tpu.dynamic_rotate %25 by %c1_i32_27 dim 1 : vector<4x4xf32>, i32 -> vector<4x4xf32>
    %cst_28 = arith.constant 0.000000e+00 : f32
    %43 = vector.broadcast %cst_28 : f32 to vector<4x4xf32>
    %44 = arith.select %9, %43, %42 : vector<4x4xi1>, vector<4x4xf32>
    %c3_i32_29 = arith.constant 3 : i32
    %45 = tpu.dynamic_rotate %25 by %c3_i32_29 dim 1 : vector<4x4xf32>, i32 -> vector<4x4xf32>
    %cst_30 = arith.constant 0.000000e+00 : f32
    %46 = vector.broadcast %cst_30 : f32 to vector<4x4xf32>
    %47 = arith.select %11, %46, %45 : vector<4x4xi1>, vector<4x4xf32>
    %c1_i32_31 = arith.constant 1 : i32
    %48 = tpu.dynamic_rotate %25 by %c1_i32_31 dim 0 : vector<4x4xf32>, i32 -> vector<4x4xf32>
    %cst_32 = arith.constant 0.000000e+00 : f32
    %49 = vector.broadcast %cst_32 : f32 to vector<4x4xf32>
    %50 = arith.select %5, %49, %48 : vector<4x4xi1>, vector<4x4xf32>
    %c3_i32_33 = arith.constant 3 : i32
    %51 = tpu.dynamic_rotate %25 by %c3_i32_33 dim 0 : vector<4x4xf32>, i32 -> vector<4x4xf32>
    %cst_34 = arith.constant 0.000000e+00 : f32
    %52 = vector.broadcast %cst_34 : f32 to vector<4x4xf32>
    %53 = arith.select %7, %52, %51 : vector<4x4xi1>, vector<4x4xf32>
    %54 = arith.subf %25, %44 : vector<4x4xf32>
    %55 = arith.subf %25, %47 : vector<4x4xf32>
    %56 = arith.subf %25, %50 : vector<4x4xf32>
    %57 = arith.subf %25, %53 : vector<4x4xf32>
    %58 = arith.subf %38, %54 : vector<4x4xf32>
    %59 = arith.mulf %58, %58 : vector<4x4xf32>
    %60 = arith.subf %39, %55 : vector<4x4xf32>
    %61 = arith.mulf %60, %60 : vector<4x4xf32>
    %62 = arith.addf %59, %61 : vector<4x4xf32>
    %63 = arith.subf %40, %56 : vector<4x4xf32>
    %64 = arith.mulf %63, %63 : vector<4x4xf32>
    %65 = arith.addf %62, %64 : vector<4x4xf32>
    %66 = arith.subf %41, %57 : vector<4x4xf32>
    %67 = arith.mulf %66, %66 : vector<4x4xf32>
    %68 = arith.addf %65, %67 : vector<4x4xf32>
    %c0_35 = arith.constant 0 : index
    %c0_36 = arith.constant 0 : index
    %c0_37 = arith.constant 0 : index
    %c0_38 = arith.constant 0 : index
    %69 = vector.load %arg5[%c0_35, %c0_36, %c0_37, %c0_38] : memref<1x1x4x4xf32, #tpu.memory_space<vmem>>, vector<1x1x4x4xf32>
    %70 = vector.shape_cast %69 : vector<1x1x4x4xf32> to vector<4x4xf32>
    %71 = vector.shape_cast %68 : vector<4x4xf32> to vector<1x1x4x4xf32>
    tpu.vector_store %arg5[%c0_35, %c0_36, %c0_37, %c0_38], %71 {strides = array<i32>} : memref<1x1x4x4xf32, #tpu.memory_space<vmem>>, vector<1x1x4x4xf32>,
    return
  }
  func.func @transform_0(%arg0: i32) -> (i32, i32) {
    %c0_i32 = arith.constant 0 : i32
    %c0_i32_0 = arith.constant 0 : i32
    %c0_i32_1 = arith.constant 0 : i32
    return %c0_i32, %c0_i32_0 : i32, i32
  }
  func.func @transform_1(%arg0: i32) -> (i32, i32) {
    %c0_i32 = arith.constant 0 : i32
    %c0_i32_0 = arith.constant 0 : i32
    %c0_i32_1 = arith.constant 0 : i32
    return %c0_i32, %c0_i32_0 : i32, i32
  }
  func.func @transform_2(%arg0: i32) -> (i32, i32, i32, i32) {
    %c0_i32 = arith.constant 0 : i32
    %c0_i32_0 = arith.constant 0 : i32
    %c0_i32_1 = arith.constant 0 : i32
    %c0_i32_2 = arith.constant 0 : i32
    return %arg0, %c0_i32, %c0_i32_0, %c0_i32_1 : i32, i32, i32, i32
  }
  func.func @transform_3(%arg0: i32) -> (i32, i32, i32, i32) {
    %c0_i32 = arith.constant 0 : i32
    %c0_i32_0 = arith.constant 0 : i32
    %c0_i32_1 = arith.constant 0 : i32
    %c0_i32_2 = arith.constant 0 : i32
    return %arg0, %c0_i32, %c0_i32_0, %c0_i32_1 : i32, i32, i32, i32
  }
  func.func @transform_4(%arg0: i32) -> (i32, i32, i32, i32) {
    %c0_i32 = arith.constant 0 : i32
    %c0_i32_0 = arith.constant 0 : i32
    %c0_i32_1 = arith.constant 0 : i32
    %c0_i32_2 = arith.constant 0 : i32
    return %arg0, %c0_i32, %c0_i32_0, %c0_i32_1 : i32, i32, i32, i32
  }
}

</mosaic_0001>

<llo_original>
// kernel: tpu_custom_call.1
$region0: #{tpu_custom_call.1}
  #allocation0 [shape = 'u32[]', space=smem, size = 0x4, offset = 0x4, fixed_abs, tag = 'smem constant byte address 0x4 - core index']
  #allocation1 [shape = 'u32[144,128]{1,0:T(1,128)}', space=vmem, size = 0x12000, scoped, tag = 'internal scratch']
  %s0 = inlined_call_operand.vmem [shape: f32[4,16], index: 0, kind: input, shape index: {}]
  %s1 = inlined_call_operand.vmem [shape: f32[16,4], index: 1, kind: input, shape index: {}]
  %s2 = inlined_call_operand.hbm [shape: f32[2,4,16,16], index: 2, kind: input, shape index: {}]
  %s3 = inlined_call_operand.hbm [shape: f32[2,4,16,16], index: 3, kind: input, shape index: {}]
  %s4 = inlined_call_operand.hbm [shape: f32[2,1,4,4], index: 4, kind: output, shape index: {}]
  %s5 = sld [smem:[#allocation0]]
  $region57: #{tpu_custom_call.1} parent=0
    _
  %s7 = ssub.s32 1, %s5
  %s8 = scalar_select 0, %s7, %s5
  $region1: #{tpu_custom_call.1} parent=0
    #allocation2 [shape = 'u8[65536]{0}', space=vmem, size = 0x10000, scoped, tag = 'input window, operand 2']
    #allocation3 [shape = 's32[2]{0}', space=sflag, size = 0x8, scoped, tag = 'scoped memory for tpu_custom_call.1']
    #allocation4 [shape = 's32[2]{0}', space=sflag, size = 0x8, scoped, tag = 'scoped memory for tpu_custom_call.1']
    #allocation5 [shape = 'u8[65536]{0}', space=vmem, size = 0x10000, scoped, tag = 'input window, operand 3']
    #allocation6 [shape = 's32[2]{0}', space=sflag, size = 0x8, scoped, tag = 'scoped memory for tpu_custom_call.1']
    #allocation7 [shape = 'u8[4096]{0}', space=vmem, size = 0x1000, scoped, tag = 'output window, operand 0']
    %9 = vsyncpa [#allocation3], 0
    %s10 = scalar_lea.sflag [#allocation3], 1
    %11 = vsyncpa %s10, 0
    %12 = vsyncpa [#allocation6], 0
    %s13 = scalar_lea.sflag [#allocation6], 1
    %14 = vsyncpa %s13, 0
    %15 = vsyncpa [#allocation4], 0
    %s16 = scalar_lea.sflag [#allocation4], 1
    %17 = vsyncpa %s16, 0
    loop: start=0, step=1, limit=4
    $region2: #{tpu_custom_call.1} parent=1 // loop_pre_header
      _
    $region3: #{tpu_custom_call.1} parent=1 // loop_header
      %s19 = sphi 0, %s23
      %p20 = scmp.ge.s32.totalorder %s19, 4
      %s27 = sphi 0, %s27
      %s29 = sphi 0, %s27
      %s30 = sphi 0, %s29
      %s44 = sphi 0, %s30
      %s48 = sphi 0, %s48
      %s50 = sphi 0, %s48
      %s51 = sphi 0, %s50
      %s65 = sphi 0, %s51
      %s71 = sphi 0, %s73
      %s74 = sphi 0, %s71
      %s75 = sphi 0, %s74
      %s91 = sphi 0, %s75
      %s97 = sphi 0, %s99
      %s100 = sphi 0, %s97
      %s101 = sphi 0, %s100
      %s117 = sphi 0, %s101
      %s123 = sphi 0, %s125
      %s126 = sphi 0, %s123
      %s127 = sphi 0, %s126
      %s143 = sphi 0, %s127
    $region4: #{tpu_custom_call.1} parent=1 // loop_header_branch
      %22 = sbr.rel (%p20) target = $region8
    $region5: #{tpu_custom_call.1} parent=1 // loop_body
      %s24 = ssub.s32 %s19, 1
      %s25 = ssub.s32 %s19, 2
      %s26 = sadd.s32 %s19, 1
      %s28 = sadd.s32 %s27, 1
      %p31 = scmp.eq.s32.totalorder %s19, 1
      %p32 = scmp.ne.s32.totalorder %s27, %s29
      %p33 = scmp.eq.s32.totalorder %s19, 0
      %p34 = por %p32, %p33
      %p35 = scmp.ne.s32.totalorder %s27, %s29
      %p36 = scmp.eq.s32.totalorder %s24, 1
      %p37 = por %p35, %p36
      %p38 = scmp.ne.s32.totalorder %s29, %s30
      %p39 = scmp.eq.s32.totalorder %s24, 0
      %p40 = por %p38, %p39
      %p41 = scmp.ne.s32.totalorder %s29, %s30
      %p42 = scmp.eq.s32.totalorder %s25, 1
      %p43 = por %p41, %p42
      %p45 = scmp.ne.s32.totalorder %s30, %s44
      %p46 = scmp.eq.s32.totalorder %s25, 0
      %p47 = por %p45, %p46
      %s49 = sadd.s32 %s48, 1
      %p52 = scmp.eq.s32.totalorder %s19, 1
      %p53 = scmp.ne.s32.totalorder %s48, %s50
      %p54 = scmp.eq.s32.totalorder %s19, 0
      %p55 = por %p53, %p54
      %p56 = scmp.ne.s32.totalorder %s48, %s50
      %p57 = scmp.eq.s32.totalorder %s24, 1
      %p58 = por %p56, %p57
      %p59 = scmp.ne.s32.totalorder %s50, %s51
      %p60 = scmp.eq.s32.totalorder %s24, 0
      %p61 = por %p59, %p60
      %p62 = scmp.ne.s32.totalorder %s50, %s51
      %p63 = scmp.eq.s32.totalorder %s25, 1
      %p64 = por %p62, %p63
      %p66 = scmp.ne.s32.totalorder %s51, %s65
      %p67 = scmp.eq.s32.totalorder %s25, 0
      %p68 = por %p66, %p67
      %s69 = ssub.s32 %s19, %s26
      %p70 = scmp.eq.s32.totalorder %s69, 0
      %s72 = sadd.s32 %s71, 1
      %s73 = scalar_select %p70, %s71, %s72
      %p76 = pneg %p70
      %p77 = scmp.eq.s32.totalorder %s19, 1
      %p78 = por %p76, %p77
      %p79 = scmp.ne.s32.totalorder %s71, %s74
      %p80 = scmp.eq.s32.totalorder %s19, 0
      %p81 = por %p79, %p80
      %p82 = scmp.ne.s32.totalorder %s71, %s74
      %p83 = scmp.eq.s32.totalorder %s24, 1
      %p84 = por %p82, %p83
      %p85 = scmp.ne.s32.totalorder %s74, %s75
      %p86 = scmp.eq.s32.totalorder %s24, 0
      %p87 = por %p85, %p86
      %p88 = scmp.ne.s32.totalorder %s74, %s75
      %p89 = scmp.eq.s32.totalorder %s25, 1
      %p90 = por %p88, %p89
      %p92 = scmp.ne.s32.totalorder %s75, %s91
      %p93 = scmp.eq.s32.totalorder %s25, 0
      %p94 = por %p92, %p93
      %s95 = ssub.s32 %s19, %s26
      %p96 = scmp.eq.s32.totalorder %s95, 0
      %s98 = sadd.s32 %s97, 1
      %s99 = scalar_select %p96, %s97, %s98
      %p102 = pneg %p96
      %p103 = scmp.eq.s32.totalorder %s19, 1
      %p104 = por %p102, %p103
      %p105 = scmp.ne.s32.totalorder %s97, %s100
      %p106 = scmp.eq.s32.totalorder %s19, 0
      %p107 = por %p105, %p106
      %p108 = scmp.ne.s32.totalorder %s97, %s100
      %p109 = scmp.eq.s32.totalorder %s24, 1
      %p110 = por %p108, %p109
      %p111 = scmp.ne.s32.totalorder %s100, %s101
      %p112 = scmp.eq.s32.totalorder %s24, 0
      %p113 = por %p111, %p112
      %p114 = scmp.ne.s32.totalorder %s100, %s101
      %p115 = scmp.eq.s32.totalorder %s25, 1
      %p116 = por %p114, %p115
      %p118 = scmp.ne.s32.totalorder %s101, %s117
      %p119 = scmp.eq.s32.totalorder %s25, 0
      %p120 = por %p118, %p119
      %s121 = ssub.s32 %s19, %s26
      %p122 = scmp.eq.s32.totalorder %s121, 0
      %s124 = sadd.s32 %s123, 1
      %s125 = scalar_select %p122, %s123, %s124
      %p128 = pneg %p122
      %p129 = scmp.eq.s32.totalorder %s19, 1
      %p130 = por %p128, %p129
      %p131 = scmp.ne.s32.totalorder %s123, %s126
      %p132 = scmp.eq.s32.totalorder %s19, 0
      %p133 = por %p131, %p132
      %p134 = scmp.ne.s32.totalorder %s123, %s126
      %p135 = scmp.eq.s32.totalorder %s24, 1
      %p136 = por %p134, %p135
      %p137 = scmp.ne.s32.totalorder %s126, %s127
      %p138 = scmp.eq.s32.totalorder %s24, 0
      %p139 = por %p137, %p138
      %p140 = scmp.ne.s32.totalorder %s126, %s127
      %p141 = scmp.eq.s32.totalorder %s25, 1
      %p142 = por %p140, %p141
      %p144 = scmp.ne.s32.totalorder %s127, %s143
      %p145 = scmp.eq.s32.totalorder %s25, 0
      %p146 = por %p144, %p145
      %p147 = scmp.le.s32.totalorder 1, %s19
      %p148 = scmp.lt.s32.totalorder %s19, 3
      %p149 = pnand %p147, %p148
      %p150 = pneg %p149
      // Predicated region
      $region9: #{tpu_custom_call.1} parent=5 // pred_check
        _
      $region10: #{tpu_custom_call.1} parent=5 // pred_check_branch
        %152 = sbr.rel (%p149) target = $region12
      $region11: #{tpu_custom_call.1} parent=5 // pred_region
        %s153 = ssub.s32 %s19, 1
        // Predicated region
        $region13: #{tpu_custom_call.1} parent=11 // pred_check
          %p154 = pneg %p40
        $region14: #{tpu_custom_call.1} parent=11 // pred_check_branch
          %156 = sbr.rel (%p154) target = $region16
        $region15: #{tpu_custom_call.1} parent=11 // pred_region
          _
        $region16: #{tpu_custom_call.1} parent=11 // pred_fallthru
          _
        // Predicated region
        $region17: #{tpu_custom_call.1} parent=11 // pred_check
          %p157 = pneg %p61
        $region18: #{tpu_custom_call.1} parent=11 // pred_check_branch
          %159 = sbr.rel (%p157) target = $region20
        $region19: #{tpu_custom_call.1} parent=11 // pred_region
          _
        $region20: #{tpu_custom_call.1} parent=11 // pred_fallthru
          _
      $region12: #{tpu_custom_call.1} parent=5 // pred_fallthru
        _
      %p160 = scmp.lt.s32.totalorder %s19, 2
      // Predicated region
      $region21: #{tpu_custom_call.1} parent=5 // pred_check
        %p161 = pneg %p160
      $region22: #{tpu_custom_call.1} parent=5 // pred_check_branch
        %163 = sbr.rel (%p161) target = $region24
      $region23: #{tpu_custom_call.1} parent=5 // pred_region
        // Predicated region
        $region25: #{tpu_custom_call.1} parent=23 // pred_check
          %p164 = pneg %p81
        $region26: #{tpu_custom_call.1} parent=23 // pred_check_branch
          %166 = sbr.rel (%p164) target = $region28
        $region27: #{tpu_custom_call.1} parent=23 // pred_region
          %s167 = sand.u32 %s71, 1
          %s168 = scalar_lea.sflag [#allocation3], %s167
          %s169 = sand.u32 %s71, 1
          %s170 = smul.addr %s169, 64
          %s171 = scalar_lea.vmem [#allocation2], %s170
          %s173 = ssub.s32 1024, 1024
          %174 = vsyncadd %s168, %s173
          %s175 = smul.addr %s19, 8
          %s176 = smul.addr %s175, 128
          %s177 = scalar_lea.hbm %s2, %s176
          %s178 = sshll.u32 %s171, 4
          %s179 = int_to_ptr.vmem [resolvable:$true] %s178
          %184 = dma.hbm_to_vmem [thread:$0]  %s177, 1024, %s179, %s168, 128, 128, 8
        $region28: #{tpu_custom_call.1} parent=23 // pred_fallthru
          _
        // Predicated region
        $region29: #{tpu_custom_call.1} parent=23 // pred_check
          %p185 = pneg %p107
        $region30: #{tpu_custom_call.1} parent=23 // pred_check_branch
          %187 = sbr.rel (%p185) target = $region32
        $region31: #{tpu_custom_call.1} parent=23 // pred_region
          %s188 = sand.u32 %s97, 1
          %s189 = scalar_lea.sflag [#allocation6], %s188
          %s190 = sand.u32 %s97, 1
          %s191 = smul.addr %s190, 64
          %s192 = scalar_lea.vmem [#allocation5], %s191
          %s194 = ssub.s32 1024, 1024
          %195 = vsyncadd %s189, %s194
          %s196 = smul.addr %s19, 8
          %s197 = smul.addr %s196, 128
          %s198 = scalar_lea.hbm %s3, %s197
          %s199 = sshll.u32 %s192, 4
          %s200 = int_to_ptr.vmem [resolvable:$true] %s199
          %205 = dma.hbm_to_vmem [thread:$0]  %s198, 1024, %s200, %s189, 128, 128, 8
        $region32: #{tpu_custom_call.1} parent=23 // pred_fallthru
          _
      $region24: #{tpu_custom_call.1} parent=5 // pred_fallthru
        _
      %p206 = scmp.le.s32.totalorder 1, %s19
      %p207 = scmp.lt.s32.totalorder %s19, 3
      %p208 = pnand %p206, %p207
      %p209 = pneg %p208
      // Predicated region
      $region33: #{tpu_custom_call.1} parent=5 // pred_check
        _
      $region34: #{tpu_custom_call.1} parent=5 // pred_check_branch
        %211 = sbr.rel (%p208) target = $region36
      $region35: #{tpu_custom_call.1} parent=5 // pred_region
        %s212 = ssub.s32 %s19, 1
        %s213 = sand.u32 %s74, 1
        %s214 = scalar_lea.sflag [#allocation3], %s213
        %s215 = sand.u32 %s74, 1
        %s216 = smul.addr %s215, 64
        %s217 = scalar_lea.vmem [#allocation2], %s216
        // Predicated region
        $region37: #{tpu_custom_call.1} parent=35 // pred_check
          %p218 = pneg %p87
        $region38: #{tpu_custom_call.1} parent=35 // pred_check_branch
          %220 = sbr.rel (%p218) target = $region40
        $region39: #{tpu_custom_call.1} parent=35 // pred_region
          %221 = dma.done %s214, 1024
        $region40: #{tpu_custom_call.1} parent=35 // pred_fallthru
          _
        %s222 = sand.u32 %s100, 1
        %s223 = scalar_lea.sflag [#allocation6], %s222
        %s224 = sand.u32 %s100, 1
        %s225 = smul.addr %s224, 64
        %s226 = scalar_lea.vmem [#allocation5], %s225
        // Predicated region
        $region41: #{tpu_custom_call.1} parent=35 // pred_check
          %p227 = pneg %p113
        $region42: #{tpu_custom_call.1} parent=35 // pred_check_branch
          %229 = sbr.rel (%p227) target = $region44
        $region43: #{tpu_custom_call.1} parent=35 // pred_region
          %230 = dma.done %s223, 1024
        $region44: #{tpu_custom_call.1} parent=35 // pred_fallthru
          _
        %p231 = pneg %p40
        %p232 = pneg %p37
        %p233 = pneg %p61
        %p234 = pneg %p58
        %s235 = sand.u32 %s74, 1
        %s236 = scalar_lea.sflag [#allocation3], %s235
        %s237 = sand.u32 %s74, 1
        %s238 = smul.addr %s237, 64
        %s239 = scalar_lea.vmem [#allocation2], %s238
        %p240 = pneg %p87
        %p241 = pneg %p84
        %s242 = sand.u32 %s100, 1
        %s243 = scalar_lea.sflag [#allocation6], %s242
        %s244 = sand.u32 %s100, 1
        %s245 = smul.addr %s244, 64
        %s246 = scalar_lea.vmem [#allocation5], %s245
        %p247 = pneg %p113
        %p248 = pneg %p110
        %p249 = pneg %p139
        %p250 = pneg %p136
        %s251 = sand.u32 %s126, 1
        %s252 = scalar_lea.sflag [#allocation4], %s251
        %s253 = sand.u32 %s126, 1
        %s254 = smul.addr %s253, 4
        %s255 = scalar_lea.vmem [#allocation7], %s254
        %v256 = vld [vmem:[%s0] sm:$0xf]
        %v257 = vld [vmem:[%s1] sm:$0xff]
        %v258 = vld [vmem:[%s1 + $0x8] sm:$0xff]
        %v259 = vlaneseq
        %v260 = vshrl.u32 %v259, 7
        %v261 = vlaneseq
        %v262 = vand.u32 %v261, 127
        %vm263 = vcmp.eq.s32.totalorder %v260, 0
        %vm264 = vcmp.eq.s32.totalorder %v260, 3
        %vm265 = vcmp.eq.s32.totalorder %v262, 0
        %vm266 = vcmp.eq.s32.totalorder %v262, 3
        %v267 = vld [vmem:[%s217] sm:$0xff]
        %v268 = vld [vmem:[%s217 + $0x8] sm:$0xff]
        %v269 = vld [vmem:[%s217 + $0x10] sm:$0xff]
        %v270 = vld [vmem:[%s217 + $0x18] sm:$0xff]
        %v271 = vld [vmem:[%s217 + $0x20] sm:$0xff]
        %v272 = vld [vmem:[%s217 + $0x28] sm:$0xff]
        %v273 = vld [vmem:[%s217 + $0x30] sm:$0xff]
        %v274 = vld [vmem:[%s217 + $0x38] sm:$0xff]
        %vm275 = vcmask 130048
        %v276 = vsel %vm275, %v267, 0.0
        %v277 = vsel %vm275, %v269, 0.0
        %v278 = vadd.f32 %v276, %v277
        %v279 = vsel %vm275, %v271, 0.0
        %v280 = vadd.f32 %v278, %v279
        %v281 = vsel %vm275, %v273, 0.0
        %v282 = vadd.f32 %v280, %v281
        %v283 = vsel %vm275, %v268, 0.0
        %v284 = vsel %vm275, %v270, 0.0
        %v285 = vadd.f32 %v283, %v284
        %v286 = vsel %vm275, %v272, 0.0
        %v287 = vadd.f32 %v285, %v286
        %v288 = vsel %vm275, %v274, 0.0
        %v289 = vadd.f32 %v287, %v288
        %v290 = vrcp.pop 4.0
        %v291 = vmul.f32 %v282, %v290
        %v292 = vmul.f32 %v289, %v290
        %v294 = vsel %vm275, %v256, 0
        %296 = vmatprep.subr.mxu0 0.0
        %297 = vmatpush1.msra.mxu0 0.0
        %298 = vmatprep.subr.mxu0 0.0
        %299 = vmatpush1.msra.mxu0 0.0
        %300 = vmatprep.subr.mxu0 0.0
        %301 = vmatpush1.msra.mxu0 0.0
        %302 = vmatprep.subr.mxu0 0.0
        %303 = vmatpush1.msra.mxu0 0.0
        %304 = vmatprep.subr.mxu0 0.0
        %305 = vmatpush1.msra.mxu0 0.0
        %306 = vmatprep.subr.mxu0 0.0
        %307 = vmatpush1.msra.mxu0 0.0
        %308 = vmatprep.subr.mxu0 0.0
        %309 = vmatpush1.msra.mxu0 0.0
        %310 = vmatprep.subr.mxu0 0.0
        %311 = vmatpush1.msra.mxu0 0.0
        %312 = vmatprep.subr.mxu0 0.0
        %313 = vmatpush1.msra.mxu0 0.0
        %314 = vmatprep.subr.mxu0 0.0
        %315 = vmatpush1.msra.mxu0 0.0
        %316 = vmatprep.subr.mxu0 0.0
        %317 = vmatpush1.msra.mxu0 0.0
        %318 = vmatprep.subr.mxu0 0.0
        %319 = vmatpush1.msra.mxu0 0.0
        %320 = vmatprep.subr.mxu0 0.0
        %321 = vmatpush1.msra.mxu0 0.0
        %322 = vmatprep.subr.mxu0 0.0
        %323 = vmatpush1.msra.mxu0 0.0
        %324 = vmatprep.subr.mxu0 0.0
        %v325 = vand.u32 %v292, 4294901760
        %326 = vmatpush1.msra.mxu0 %v325
        %327 = vmatprep.subr.mxu0 0.0
        %v328 = vand.u32 %v291, 4294901760
        %329 = vmatpush1.msra.mxu0 %v328
        %330 = vmatprep.subr.mxu0 0.0
        %331 = vmatpush2.msra.mxu0 0.0
        %332 = vmatprep.subr.mxu0 0.0
        %333 = vmatpush2.msra.mxu0 0.0
        %334 = vmatprep.subr.mxu0 0.0
        %335 = vmatpush2.msra.mxu0 0.0
        %336 = vmatprep.subr.mxu0 0.0
        %337 = vmatpush2.msra.mxu0 0.0
        %338 = vmatprep.subr.mxu0 0.0
        %339 = vmatpush2.msra.mxu0 0.0
        %340 = vmatprep.subr.mxu0 0.0
        %341 = vmatpush2.msra.mxu0 0.0
        %342 = vmatprep.subr.mxu0 0.0
        %343 = vmatpush2.msra.mxu0 0.0
        %344 = vmatprep.subr.mxu0 0.0
        %345 = vmatpush2.msra.mxu0 0.0
        %346 = vmatprep.subr.mxu0 0.0
        %347 = vmatpush2.msra.mxu0 0.0
        %348 = vmatprep.subr.mxu0 0.0
        %349 = vmatpush2.msra.mxu0 0.0
        %350 = vmatprep.subr.mxu0 0.0
        %351 = vmatpush2.msra.mxu0 0.0
        %352 = vmatprep.subr.mxu0 0.0
        %353 = vmatpush2.msra.mxu0 0.0
        %354 = vmatprep.subr.mxu0 0.0
        %355 = vmatpush2.msra.mxu0 0.0
        %356 = vmatprep.subr.mxu0 0.0
        %357 = vmatpush2.msra.mxu0 0.0
        %358 = vmatprep.subr.mxu0 0.0
        %359 = vmatpush2.msra.mxu0 0.0
        %360 = vmatprep.subr.mxu0 0.0
        %361 = vmatpush2.msra.mxu0 0.0
        %362 = vmatprep.mubr.f32.mxu0 0.0
        %v363 = vand.u32 %v294, 4294901760
        %v364 = vsub.f32 %v294, %v363
        %v365 = vand.u32 %v364, 4294901760
        %v366 = vsub.f32 %v364, %v365
        %v367 = vand.u32 %v366, 4294901760
        %368 = vmatmul.mubr.f32.gmra.mxu0 %v367
        %v369 = vpop.f32.mrf.mxu0
        %v370 = vadd.f32 0.0, %v369
        %v371 = vpop.f32.mrf.mxu0
        %372 = vdwg.mxu0
        %373 = vmatprep.subr.mxu0 0.0
        %374 = vmatpush1.msra.mxu0 0.0
        %375 = vmatprep.subr.mxu0 0.0
        %376 = vmatpush1.msra.mxu0 0.0
        %377 = vmatprep.subr.mxu0 0.0
        %378 = vmatpush1.msra.mxu0 0.0
        %379 = vmatprep.subr.mxu0 0.0
        %380 = vmatpush1.msra.mxu0 0.0
        %381 = vmatprep.subr.mxu0 0.0
        %382 = vmatpush1.msra.mxu0 0.0
        %383 = vmatprep.subr.mxu0 0.0
        %384 = vmatpush1.msra.mxu0 0.0
        %385 = vmatprep.subr.mxu0 0.0
        %386 = vmatpush1.msra.mxu0 0.0
        %387 = vmatprep.subr.mxu0 0.0
        %388 = vmatpush1.msra.mxu0 0.0
        %389 = vmatprep.subr.mxu0 0.0
        %390 = vmatpush1.msra.mxu0 0.0
        %391 = vmatprep.subr.mxu0 0.0
        %392 = vmatpush1.msra.mxu0 0.0
        %393 = vmatprep.subr.mxu0 0.0
        %394 = vmatpush1.msra.mxu0 0.0
        %395 = vmatprep.subr.mxu0 0.0
        %396 = vmatpush1.msra.mxu0 0.0
        %397 = vmatprep.subr.mxu0 0.0
        %398 = vmatpush1.msra.mxu0 0.0
        %399 = vmatprep.subr.mxu0 0.0
        %400 = vmatpush1.msra.mxu0 0.0
        %401 = vmatprep.subr.mxu0 0.0
        %v402 = vand.u32 %v292, 4294901760
        %v403 = vsub.f32 %v292, %v402
        %v404 = vand.u32 %v403, 4294901760
        %v405 = vsub.f32 %v403, %v404
        %v406 = vand.u32 %v405, 4294901760
        %407 = vmatpush1.msra.mxu0 %v406
        %408 = vmatprep.subr.mxu0 0.0
        %v409 = vand.u32 %v291, 4294901760
        %v410 = vsub.f32 %v291, %v409
        %v411 = vand.u32 %v410, 4294901760
        %v412 = vsub.f32 %v410, %v411
        %v413 = vand.u32 %v412, 4294901760
        %414 = vmatpush1.msra.mxu0 %v413
        %415 = vmatprep.subr.mxu0 0.0
        %416 = vmatpush2.msra.mxu0 0.0
        %417 = vmatprep.subr.mxu0 0.0
        %418 = vmatpush2.msra.mxu0 0.0
        %419 = vmatprep.subr.mxu0 0.0
        %420 = vmatpush2.msra.mxu0 0.0
        %421 = vmatprep.subr.mxu0 0.0
        %422 = vmatpush2.msra.mxu0 0.0
        %423 = vmatprep.subr.mxu0 0.0
        %424 = vmatpush2.msra.mxu0 0.0
        %425 = vmatprep.subr.mxu0 0.0
        %426 = vmatpush2.msra.mxu0 0.0
        %427 = vmatprep.subr.mxu0 0.0
        %428 = vmatpush2.msra.mxu0 0.0
        %429 = vmatprep.subr.mxu0 0.0
        %430 = vmatpush2.msra.mxu0 0.0
        %431 = vmatprep.subr.mxu0 0.0
        %432 = vmatpush2.msra.mxu0 0.0
        %433 = vmatprep.subr.mxu0 0.0
        %434 = vmatpush2.msra.mxu0 0.0
        %435 = vmatprep.subr.mxu0 0.0
        %436 = vmatpush2.msra.mxu0 0.0
        %437 = vmatprep.subr.mxu0 0.0
        %438 = vmatpush2.msra.mxu0 0.0
        %439 = vmatprep.subr.mxu0 0.0
        %440 = vmatpush2.msra.mxu0 0.0
        %441 = vmatprep.subr.mxu0 0.0
        %442 = vmatpush2.msra.mxu0 0.0
        %443 = vmatprep.subr.mxu0 0.0
        %444 = vmatpush2.msra.mxu0 0.0
        %445 = vmatprep.subr.mxu0 0.0
        %446 = vmatpush2.msra.mxu0 0.0
        %447 = vmatprep.mubr.f32.mxu0 0.0
        %v448 = vand.u32 %v294, 4294901760
        %449 = vmatmul.mubr.f32.gmra.mxu0 %v448
        %v450 = vpop.f32.mrf.mxu0
        %v451 = vadd.f32 %v370, %v450
        %v452 = vpop.f32.mrf.mxu0
        %453 = vdwg.mxu0
        %454 = vmatprep.subr.mxu0 0.0
        %455 = vmatpush1.msra.mxu0 0.0
        %456 = vmatprep.subr.mxu0 0.0
        %457 = vmatpush1.msra.mxu0 0.0
        %458 = vmatprep.subr.mxu0 0.0
        %459 = vmatpush1.msra.mxu0 0.0
        %460 = vmatprep.subr.mxu0 0.0
        %461 = vmatpush1.msra.mxu0 0.0
        %462 = vmatprep.subr.mxu0 0.0
        %463 = vmatpush1.msra.mxu0 0.0
        %464 = vmatprep.subr.mxu0 0.0
        %465 = vmatpush1.msra.mxu0 0.0
        %466 = vmatprep.subr.mxu0 0.0
        %467 = vmatpush1.msra.mxu0 0.0
        %468 = vmatprep.subr.mxu0 0.0
        %469 = vmatpush1.msra.mxu0 0.0
        %470 = vmatprep.subr.mxu0 0.0
        %471 = vmatpush1.msra.mxu0 0.0
        %472 = vmatprep.subr.mxu0 0.0
        %473 = vmatpush1.msra.mxu0 0.0
        %474 = vmatprep.subr.mxu0 0.0
        %475 = vmatpush1.msra.mxu0 0.0
        %476 = vmatprep.subr.mxu0 0.0
        %477 = vmatpush1.msra.mxu0 0.0
        %478 = vmatprep.subr.mxu0 0.0
        %479 = vmatpush1.msra.mxu0 0.0
        %480 = vmatprep.subr.mxu0 0.0
        %481 = vmatpush1.msra.mxu0 0.0
        %482 = vmatprep.subr.mxu0 0.0
        %v483 = vand.u32 %v292, 4294901760
        %v484 = vsub.f32 %v292, %v483
        %485 = vmatpush1.msra.mxu0 %v484
        %486 = vmatprep.subr.mxu0 0.0
        %v487 = vand.u32 %v291, 4294901760
        %v488 = vsub.f32 %v291, %v487
        %489 = vmatpush1.msra.mxu0 %v488
        %490 = vmatprep.subr.mxu0 0.0
        %491 = vmatpush2.msra.mxu0 0.0
        %492 = vmatprep.subr.mxu0 0.0
        %493 = vmatpush2.msra.mxu0 0.0
        %494 = vmatprep.subr.mxu0 0.0
        %495 = vmatpush2.msra.mxu0 0.0
        %496 = vmatprep.subr.mxu0 0.0
        %497 = vmatpush2.msra.mxu0 0.0
        %498 = vmatprep.subr.mxu0 0.0
        %499 = vmatpush2.msra.mxu0 0.0
        %500 = vmatprep.subr.mxu0 0.0
        %501 = vmatpush2.msra.mxu0 0.0
        %502 = vmatprep.subr.mxu0 0.0
        %503 = vmatpush2.msra.mxu0 0.0
        %504 = vmatprep.subr.mxu0 0.0
        %505 = vmatpush2.msra.mxu0 0.0
        %506 = vmatprep.subr.mxu0 0.0
        %507 = vmatpush2.msra.mxu0 0.0
        %508 = vmatprep.subr.mxu0 0.0
        %509 = vmatpush2.msra.mxu0 0.0
        %510 = vmatprep.subr.mxu0 0.0
        %511 = vmatpush2.msra.mxu0 0.0
        %512 = vmatprep.subr.mxu0 0.0
        %513 = vmatpush2.msra.mxu0 0.0
        %514 = vmatprep.subr.mxu0 0.0
        %515 = vmatpush2.msra.mxu0 0.0
        %516 = vmatprep.subr.mxu0 0.0
        %517 = vmatpush2.msra.mxu0 0.0
        %518 = vmatprep.subr.mxu0 0.0
        %519 = vmatpush2.msra.mxu0 0.0
        %520 = vmatprep.subr.mxu0 0.0
        %521 = vmatpush2.msra.mxu0 0.0
        %522 = vmatprep.mubr.f32.mxu0 0.0
        %v523 = vand.u32 %v294, 4294901760
        %v524 = vsub.f32 %v294, %v523
        %525 = vmatmul.mubr.f32.gmra.mxu0 %v524
        %v526 = vpop.f32.mrf.mxu0
        %v527 = vadd.f32 %v451, %v526
        %v528 = vpop.f32.mrf.mxu0
        %529 = vdwg.mxu0
        %530 = vmatprep.subr.mxu0 0.0
        %531 = vmatpush1.msra.mxu0 0.0
        %532 = vmatprep.subr.mxu0 0.0
        %533 = vmatpush1.msra.mxu0 0.0
        %534 = vmatprep.subr.mxu0 0.0
        %535 = vmatpush1.msra.mxu0 0.0
        %536 = vmatprep.subr.mxu0 0.0
        %537 = vmatpush1.msra.mxu0 0.0
        %538 = vmatprep.subr.mxu0 0.0
        %539 = vmatpush1.msra.mxu0 0.0
        %540 = vmatprep.subr.mxu0 0.0
        %541 = vmatpush1.msra.mxu0 0.0
        %542 = vmatprep.subr.mxu0 0.0
        %543 = vmatpush1.msra.mxu0 0.0
        %544 = vmatprep.subr.mxu0 0.0
        %545 = vmatpush1.msra.mxu0 0.0
        %546 = vmatprep.subr.mxu0 0.0
        %547 = vmatpush1.msra.mxu0 0.0
        %548 = vmatprep.subr.mxu0 0.0
        %549 = vmatpush1.msra.mxu0 0.0
        %550 = vmatprep.subr.mxu0 0.0
        %551 = vmatpush1.msra.mxu0 0.0
        %552 = vmatprep.subr.mxu0 0.0
        %553 = vmatpush1.msra.mxu0 0.0
        %554 = vmatprep.subr.mxu0 0.0
        %555 = vmatpush1.msra.mxu0 0.0
        %556 = vmatprep.subr.mxu0 0.0
        %557 = vmatpush1.msra.mxu0 0.0
        %558 = vmatprep.subr.mxu0 0.0
        %v559 = vand.u32 %v292, 4294901760
        %560 = vmatpush1.msra.mxu0 %v559
        %561 = vmatprep.subr.mxu0 0.0
        %v562 = vand.u32 %v291, 4294901760
        %563 = vmatpush1.msra.mxu0 %v562
        %564 = vmatprep.subr.mxu0 0.0
        %565 = vmatpush2.msra.mxu0 0.0
        %566 = vmatprep.subr.mxu0 0.0
        %567 = vmatpush2.msra.mxu0 0.0
        %568 = vmatprep.subr.mxu0 0.0
        %569 = vmatpush2.msra.mxu0 0.0
        %570 = vmatprep.subr.mxu0 0.0
        %571 = vmatpush2.msra.mxu0 0.0
        %572 = vmatprep.subr.mxu0 0.0
        %573 = vmatpush2.msra.mxu0 0.0
        %574 = vmatprep.subr.mxu0 0.0
        %575 = vmatpush2.msra.mxu0 0.0
        %576 = vmatprep.subr.mxu0 0.0
        %577 = vmatpush2.msra.mxu0 0.0
        %578 = vmatprep.subr.mxu0 0.0
        %579 = vmatpush2.msra.mxu0 0.0
        %580 = vmatprep.subr.mxu0 0.0
        %581 = vmatpush2.msra.mxu0 0.0
        %582 = vmatprep.subr.mxu0 0.0
        %583 = vmatpush2.msra.mxu0 0.0
        %584 = vmatprep.subr.mxu0 0.0
        %585 = vmatpush2.msra.mxu0 0.0
        %586 = vmatprep.subr.mxu0 0.0
        %587 = vmatpush2.msra.mxu0 0.0
        %588 = vmatprep.subr.mxu0 0.0
        %589 = vmatpush2.msra.mxu0 0.0
        %590 = vmatprep.subr.mxu0 0.0
        %591 = vmatpush2.msra.mxu0 0.0
        %592 = vmatprep.subr.mxu0 0.0
        %593 = vmatpush2.msra.mxu0 0.0
        %594 = vmatprep.subr.mxu0 0.0
        %595 = vmatpush2.msra.mxu0 0.0
        %596 = vmatprep.mubr.f32.mxu0 0.0
        %v597 = vand.u32 %v294, 4294901760
        %v598 = vsub.f32 %v294, %v597
        %v599 = vand.u32 %v598, 4294901760
        %600 = vmatmul.mubr.f32.gmra.mxu0 %v599
        %v601 = vpop.f32.mrf.mxu0
        %v602 = vadd.f32 %v527, %v601
        %v603 = vpop.f32.mrf.mxu0
        %604 = vdwg.mxu0
        %605 = vmatprep.subr.mxu0 0.0
        %606 = vmatpush1.msra.mxu0 0.0
        %607 = vmatprep.subr.mxu0 0.0
        %608 = vmatpush1.msra.mxu0 0.0
        %609 = vmatprep.subr.mxu0 0.0
        %610 = vmatpush1.msra.mxu0 0.0
        %611 = vmatprep.subr.mxu0 0.0
        %612 = vmatpush1.msra.mxu0 0.0
        %613 = vmatprep.subr.mxu0 0.0
        %614 = vmatpush1.msra.mxu0 0.0
        %615 = vmatprep.subr.mxu0 0.0
        %616 = vmatpush1.msra.mxu0 0.0
        %617 = vmatprep.subr.mxu0 0.0
        %618 = vmatpush1.msra.mxu0 0.0
        %619 = vmatprep.subr.mxu0 0.0
        %620 = vmatpush1.msra.mxu0 0.0
        %621 = vmatprep.subr.mxu0 0.0
        %622 = vmatpush1.msra.mxu0 0.0
        %623 = vmatprep.subr.mxu0 0.0
        %624 = vmatpush1.msra.mxu0 0.0
        %625 = vmatprep.subr.mxu0 0.0
        %626 = vmatpush1.msra.mxu0 0.0
        %627 = vmatprep.subr.mxu0 0.0
        %628 = vmatpush1.msra.mxu0 0.0
        %629 = vmatprep.subr.mxu0 0.0
        %630 = vmatpush1.msra.mxu0 0.0
        %631 = vmatprep.subr.mxu0 0.0
        %632 = vmatpush1.msra.mxu0 0.0
        %633 = vmatprep.subr.mxu0 0.0
        %v634 = vand.u32 %v292, 4294901760
        %v635 = vsub.f32 %v292, %v634
        %v636 = vand.u32 %v635, 4294901760
        %637 = vmatpush1.msra.mxu0 %v636
        %638 = vmatprep.subr.mxu0 0.0
        %v639 = vand.u32 %v291, 4294901760
        %v640 = vsub.f32 %v291, %v639
        %v641 = vand.u32 %v640, 4294901760
        %642 = vmatpush1.msra.mxu0 %v641
        %643 = vmatprep.subr.mxu0 0.0
        %644 = vmatpush2.msra.mxu0 0.0
        %645 = vmatprep.subr.mxu0 0.0
        %646 = vmatpush2.msra.mxu0 0.0
        %647 = vmatprep.subr.mxu0 0.0
        %648 = vmatpush2.msra.mxu0 0.0
        %649 = vmatprep.subr.mxu0 0.0
        %650 = vmatpush2.msra.mxu0 0.0
        %651 = vmatprep.subr.mxu0 0.0
        %652 = vmatpush2.msra.mxu0 0.0
        %653 = vmatprep.subr.mxu0 0.0
        %654 = vmatpush2.msra.mxu0 0.0
        %655 = vmatprep.subr.mxu0 0.0
        %656 = vmatpush2.msra.mxu0 0.0
        %657 = vmatprep.subr.mxu0 0.0
        %658 = vmatpush2.msra.mxu0 0.0
        %659 = vmatprep.subr.mxu0 0.0
        %660 = vmatpush2.msra.mxu0 0.0
        %661 = vmatprep.subr.mxu0 0.0
        %662 = vmatpush2.msra.mxu0 0.0
        %663 = vmatprep.subr.mxu0 0.0
        %664 = vmatpush2.msra.mxu0 0.0
        %665 = vmatprep.subr.mxu0 0.0
        %666 = vmatpush2.msra.mxu0 0.0
        %667 = vmatprep.subr.mxu0 0.0
        %668 = vmatpush2.msra.mxu0 0.0
        %669 = vmatprep.subr.mxu0 0.0
        %670 = vmatpush2.msra.mxu0 0.0
        %671 = vmatprep.subr.mxu0 0.0
        %672 = vmatpush2.msra.mxu0 0.0
        %673 = vmatprep.subr.mxu0 0.0
        %674 = vmatpush2.msra.mxu0 0.0
        %675 = vmatprep.mubr.f32.mxu0 0.0
        %v676 = vand.u32 %v294, 4294901760
        %677 = vmatmul.mubr.f32.gmra.mxu0 %v676
        %v678 = vpop.f32.mrf.mxu0
        %v679 = vadd.f32 %v602, %v678
        %v680 = vpop.f32.mrf.mxu0
        %681 = vdwg.mxu0
        %682 = vmatprep.subr.mxu0 0.0
        %683 = vmatpush1.msra.mxu0 0.0
        %684 = vmatprep.subr.mxu0 0.0
        %685 = vmatpush1.msra.mxu0 0.0
        %686 = vmatprep.subr.mxu0 0.0
        %687 = vmatpush1.msra.mxu0 0.0
        %688 = vmatprep.subr.mxu0 0.0
        %689 = vmatpush1.msra.mxu0 0.0
        %690 = vmatprep.subr.mxu0 0.0
        %691 = vmatpush1.msra.mxu0 0.0
        %692 = vmatprep.subr.mxu0 0.0
        %693 = vmatpush1.msra.mxu0 0.0
        %694 = vmatprep.subr.mxu0 0.0
        %695 = vmatpush1.msra.mxu0 0.0
        %696 = vmatprep.subr.mxu0 0.0
        %697 = vmatpush1.msra.mxu0 0.0
        %698 = vmatprep.subr.mxu0 0.0
        %699 = vmatpush1.msra.mxu0 0.0
        %700 = vmatprep.subr.mxu0 0.0
        %701 = vmatpush1.msra.mxu0 0.0
        %702 = vmatprep.subr.mxu0 0.0
        %703 = vmatpush1.msra.mxu0 0.0
        %704 = vmatprep.subr.mxu0 0.0
        %705 = vmatpush1.msra.mxu0 0.0
        %706 = vmatprep.subr.mxu0 0.0
        %707 = vmatpush1.msra.mxu0 0.0
        %708 = vmatprep.subr.mxu0 0.0
        %709 = vmatpush1.msra.mxu0 0.0
        %710 = vmatprep.subr.mxu0 0.0
        %v711 = vand.u32 %v292, 4294901760
        %712 = vmatpush1.msra.mxu0 %v711
        %713 = vmatprep.subr.mxu0 0.0
        %v714 = vand.u32 %v291, 4294901760
        %715 = vmatpush1.msra.mxu0 %v714
        %716 = vmatprep.subr.mxu0 0.0
        %717 = vmatpush2.msra.mxu0 0.0
        %718 = vmatprep.subr.mxu0 0.0
        %719 = vmatpush2.msra.mxu0 0.0
        %720 = vmatprep.subr.mxu0 0.0
        %721 = vmatpush2.msra.mxu0 0.0
        %722 = vmatprep.subr.mxu0 0.0
        %723 = vmatpush2.msra.mxu0 0.0
        %724 = vmatprep.subr.mxu0 0.0
        %725 = vmatpush2.msra.mxu0 0.0
        %726 = vmatprep.subr.mxu0 0.0
        %727 = vmatpush2.msra.mxu0 0.0
        %728 = vmatprep.subr.mxu0 0.0
        %729 = vmatpush2.msra.mxu0 0.0
        %730 = vmatprep.subr.mxu0 0.0
        %731 = vmatpush2.msra.mxu0 0.0
        %732 = vmatprep.subr.mxu0 0.0
        %733 = vmatpush2.msra.mxu0 0.0
        %734 = vmatprep.subr.mxu0 0.0
        %735 = vmatpush2.msra.mxu0 0.0
        %736 = vmatprep.subr.mxu0 0.0
        %737 = vmatpush2.msra.mxu0 0.0
        %738 = vmatprep.subr.mxu0 0.0
        %739 = vmatpush2.msra.mxu0 0.0
        %740 = vmatprep.subr.mxu0 0.0
        %741 = vmatpush2.msra.mxu0 0.0
        %742 = vmatprep.subr.mxu0 0.0
        %743 = vmatpush2.msra.mxu0 0.0
        %744 = vmatprep.subr.mxu0 0.0
        %745 = vmatpush2.msra.mxu0 0.0
        %746 = vmatprep.subr.mxu0 0.0
        %747 = vmatpush2.msra.mxu0 0.0
        %748 = vmatprep.mubr.f32.mxu0 0.0
        %v749 = vand.u32 %v294, 4294901760
        %750 = vmatmul.mubr.f32.gmra.mxu0 %v749
        %v751 = vpop.f32.mrf.mxu0
        %v752 = vadd.f32 %v679, %v751
        %v753 = vpop.f32.mrf.mxu0
        %754 = vdwg.mxu0
        %v756 = vsel %vm275, %v752, 0
        %758 = vmatprep.subr.mxu0 0.0
        %759 = vmatpush1.msra.mxu0 0.0
        %760 = vmatprep.subr.mxu0 0.0
        %761 = vmatpush1.msra.mxu0 0.0
        %762 = vmatprep.subr.mxu0 0.0
        %763 = vmatpush1.msra.mxu0 0.0
        %764 = vmatprep.subr.mxu0 0.0
        %765 = vmatpush1.msra.mxu0 0.0
        %766 = vmatprep.subr.mxu0 0.0
        %767 = vmatpush1.msra.mxu0 0.0
        %768 = vmatprep.subr.mxu0 0.0
        %769 = vmatpush1.msra.mxu0 0.0
        %770 = vmatprep.subr.mxu0 0.0
        %771 = vmatpush1.msra.mxu0 0.0
        %772 = vmatprep.subr.mxu0 0.0
        %773 = vmatpush1.msra.mxu0 0.0
        %774 = vmatprep.subr.mxu0 0.0
        %775 = vmatpush1.msra.mxu0 0.0
        %776 = vmatprep.subr.mxu0 0.0
        %777 = vmatpush1.msra.mxu0 0.0
        %778 = vmatprep.subr.mxu0 0.0
        %779 = vmatpush1.msra.mxu0 0.0
        %780 = vmatprep.subr.mxu0 0.0
        %781 = vmatpush1.msra.mxu0 0.0
        %782 = vmatprep.subr.mxu0 0.0
        %783 = vmatpush1.msra.mxu0 0.0
        %784 = vmatprep.subr.mxu0 0.0
        %785 = vmatpush1.msra.mxu0 0.0
        %786 = vmatprep.subr.mxu0 0.0
        %v787 = vand.u32 %v258, 4294901760
        %788 = vmatpush1.msra.mxu0 %v787
        %789 = vmatprep.subr.mxu0 0.0
        %v790 = vand.u32 %v257, 4294901760
        %791 = vmatpush1.msra.mxu0 %v790
        %792 = vmatprep.subr.mxu0 0.0
        %793 = vmatpush2.msra.mxu0 0.0
        %794 = vmatprep.subr.mxu0 0.0
        %795 = vmatpush2.msra.mxu0 0.0
        %796 = vmatprep.subr.mxu0 0.0
        %797 = vmatpush2.msra.mxu0 0.0
        %798 = vmatprep.subr.mxu0 0.0
        %799 = vmatpush2.msra.mxu0 0.0
        %800 = vmatprep.subr.mxu0 0.0
        %801 = vmatpush2.msra.mxu0 0.0
        %802 = vmatprep.subr.mxu0 0.0
        %803 = vmatpush2.msra.mxu0 0.0
        %804 = vmatprep.subr.mxu0 0.0
        %805 = vmatpush2.msra.mxu0 0.0
        %806 = vmatprep.subr.mxu0 0.0
        %807 = vmatpush2.msra.mxu0 0.0
        %808 = vmatprep.subr.mxu0 0.0
        %809 = vmatpush2.msra.mxu0 0.0
        %810 = vmatprep.subr.mxu0 0.0
        %811 = vmatpush2.msra.mxu0 0.0
        %812 = vmatprep.subr.mxu0 0.0
        %813 = vmatpush2.msra.mxu0 0.0
        %814 = vmatprep.subr.mxu0 0.0
        %815 = vmatpush2.msra.mxu0 0.0
        %816 = vmatprep.subr.mxu0 0.0
        %817 = vmatpush2.msra.mxu0 0.0
        %818 = vmatprep.subr.mxu0 0.0
        %819 = vmatpush2.msra.mxu0 0.0
        %820 = vmatprep.subr.mxu0 0.0
        %821 = vmatpush2.msra.mxu0 0.0
        %822 = vmatprep.subr.mxu0 0.0
        %823 = vmatpush2.msra.mxu0 0.0
        %824 = vmatprep.mubr.f32.mxu0 0.0
        %v825 = vand.u32 %v756, 4294901760
        %v826 = vsub.f32 %v756, %v825
        %v827 = vand.u32 %v826, 4294901760
        %v828 = vsub.f32 %v826, %v827
        %v829 = vand.u32 %v828, 4294901760
        %830 = vmatmul.mubr.f32.gmra.mxu0 %v829
        %v831 = vpop.f32.mrf.mxu0
        %v832 = vadd.f32 0.0, %v831
        %v833 = vpop.f32.mrf.mxu0
        %834 = vdwg.mxu0
        %835 = vmatprep.subr.mxu0 0.0
        %836 = vmatpush1.msra.mxu0 0.0
        %837 = vmatprep.subr.mxu0 0.0
        %838 = vmatpush1.msra.mxu0 0.0
        %839 = vmatprep.subr.mxu0 0.0
        %840 = vmatpush1.msra.mxu0 0.0
        %841 = vmatprep.subr.mxu0 0.0
        %842 = vmatpush1.msra.mxu0 0.0
        %843 = vmatprep.subr.mxu0 0.0
        %844 = vmatpush1.msra.mxu0 0.0
        %845 = vmatprep.subr.mxu0 0.0
        %846 = vmatpush1.msra.mxu0 0.0
        %847 = vmatprep.subr.mxu0 0.0
        %848 = vmatpush1.msra.mxu0 0.0
        %849 = vmatprep.subr.mxu0 0.0
        %850 = vmatpush1.msra.mxu0 0.0
        %851 = vmatprep.subr.mxu0 0.0
        %852 = vmatpush1.msra.mxu0 0.0
        %853 = vmatprep.subr.mxu0 0.0
        %854 = vmatpush1.msra.mxu0 0.0
        %855 = vmatprep.subr.mxu0 0.0
        %856 = vmatpush1.msra.mxu0 0.0
        %857 = vmatprep.subr.mxu0 0.0
        %858 = vmatpush1.msra.mxu0 0.0
        %859 = vmatprep.subr.mxu0 0.0
        %860 = vmatpush1.msra.mxu0 0.0
        %861 = vmatprep.subr.mxu0 0.0
        %862 = vmatpush1.msra.mxu0 0.0
        %863 = vmatprep.subr.mxu0 0.0
        %v864 = vand.u32 %v258, 4294901760
        %v865 = vsub.f32 %v258, %v864
        %v866 = vand.u32 %v865, 4294901760
        %v867 = vsub.f32 %v865, %v866
        %v868 = vand.u32 %v867, 4294901760
        %869 = vmatpush1.msra.mxu0 %v868
        %870 = vmatprep.subr.mxu0 0.0
        %v871 = vand.u32 %v257, 4294901760
        %v872 = vsub.f32 %v257, %v871
        %v873 = vand.u32 %v872, 4294901760
        %v874 = vsub.f32 %v872, %v873
        %v875 = vand.u32 %v874, 4294901760
        %876 = vmatpush1.msra.mxu0 %v875
        %877 = vmatprep.subr.mxu0 0.0
        %878 = vmatpush2.msra.mxu0 0.0
        %879 = vmatprep.subr.mxu0 0.0
        %880 = vmatpush2.msra.mxu0 0.0
        %881 = vmatprep.subr.mxu0 0.0
        %882 = vmatpush2.msra.mxu0 0.0
        %883 = vmatprep.subr.mxu0 0.0
        %884 = vmatpush2.msra.mxu0 0.0
        %885 = vmatprep.subr.mxu0 0.0
        %886 = vmatpush2.msra.mxu0 0.0
        %887 = vmatprep.subr.mxu0 0.0
        %888 = vmatpush2.msra.mxu0 0.0
        %889 = vmatprep.subr.mxu0 0.0
        %890 = vmatpush2.msra.mxu0 0.0
        %891 = vmatprep.subr.mxu0 0.0
        %892 = vmatpush2.msra.mxu0 0.0
        %893 = vmatprep.subr.mxu0 0.0
        %894 = vmatpush2.msra.mxu0 0.0
        %895 = vmatprep.subr.mxu0 0.0
        %896 = vmatpush2.msra.mxu0 0.0
        %897 = vmatprep.subr.mxu0 0.0
        %898 = vmatpush2.msra.mxu0 0.0
        %899 = vmatprep.subr.mxu0 0.0
        %900 = vmatpush2.msra.mxu0 0.0
        %901 = vmatprep.subr.mxu0 0.0
        %902 = vmatpush2.msra.mxu0 0.0
        %903 = vmatprep.subr.mxu0 0.0
        %904 = vmatpush2.msra.mxu0 0.0
        %905 = vmatprep.subr.mxu0 0.0
        %906 = vmatpush2.msra.mxu0 0.0
        %907 = vmatprep.subr.mxu0 0.0
        %908 = vmatpush2.msra.mxu0 0.0
        %909 = vmatprep.mubr.f32.mxu0 0.0
        %v910 = vand.u32 %v756, 4294901760
        %911 = vmatmul.mubr.f32.gmra.mxu0 %v910
        %v912 = vpop.f32.mrf.mxu0
        %v913 = vadd.f32 %v832, %v912
        %v914 = vpop.f32.mrf.mxu0
        %915 = vdwg.mxu0
        %916 = vmatprep.subr.mxu0 0.0
        %917 = vmatpush1.msra.mxu0 0.0
        %918 = vmatprep.subr.mxu0 0.0
        %919 = vmatpush1.msra.mxu0 0.0
        %920 = vmatprep.subr.mxu0 0.0
        %921 = vmatpush1.msra.mxu0 0.0
        %922 = vmatprep.subr.mxu0 0.0
        %923 = vmatpush1.msra.mxu0 0.0
        %924 = vmatprep.subr.mxu0 0.0
        %925 = vmatpush1.msra.mxu0 0.0
        %926 = vmatprep.subr.mxu0 0.0
        %927 = vmatpush1.msra.mxu0 0.0
        %928 = vmatprep.subr.mxu0 0.0
        %929 = vmatpush1.msra.mxu0 0.0
        %930 = vmatprep.subr.mxu0 0.0
        %931 = vmatpush1.msra.mxu0 0.0
        %932 = vmatprep.subr.mxu0 0.0
        %933 = vmatpush1.msra.mxu0 0.0
        %934 = vmatprep.subr.mxu0 0.0
        %935 = vmatpush1.msra.mxu0 0.0
        %936 = vmatprep.subr.mxu0 0.0
        %937 = vmatpush1.msra.mxu0 0.0
        %938 = vmatprep.subr.mxu0 0.0
        %939 = vmatpush1.msra.mxu0 0.0
        %940 = vmatprep.subr.mxu0 0.0
        %941 = vmatpush1.msra.mxu0 0.0
        %942 = vmatprep.subr.mxu0 0.0
        %943 = vmatpush1.msra.mxu0 0.0
        %944 = vmatprep.subr.mxu0 0.0
        %v945 = vand.u32 %v258, 4294901760
        %v946 = vsub.f32 %v258, %v945
        %947 = vmatpush1.msra.mxu0 %v946
        %948 = vmatprep.subr.mxu0 0.0
        %v949 = vand.u32 %v257, 4294901760
        %v950 = vsub.f32 %v257, %v949
        %951 = vmatpush1.msra.mxu0 %v950
        %952 = vmatprep.subr.mxu0 0.0
        %953 = vmatpush2.msra.mxu0 0.0
        %954 = vmatprep.subr.mxu0 0.0
        %955 = vmatpush2.msra.mxu0 0.0
        %956 = vmatprep.subr.mxu0 0.0
        %957 = vmatpush2.msra.mxu0 0.0
        %958 = vmatprep.subr.mxu0 0.0
        %959 = vmatpush2.msra.mxu0 0.0
        %960 = vmatprep.subr.mxu0 0.0
        %961 = vmatpush2.msra.mxu0 0.0
        %962 = vmatprep.subr.mxu0 0.0
        %963 = vmatpush2.msra.mxu0 0.0
        %964 = vmatprep.subr.mxu0 0.0
        %965 = vmatpush2.msra.mxu0 0.0
        %966 = vmatprep.subr.mxu0 0.0
        %967 = vmatpush2.msra.mxu0 0.0
        %968 = vmatprep.subr.mxu0 0.0
        %969 = vmatpush2.msra.mxu0 0.0
        %970 = vmatprep.subr.mxu0 0.0
        %971 = vmatpush2.msra.mxu0 0.0
        %972 = vmatprep.subr.mxu0 0.0
        %973 = vmatpush2.msra.mxu0 0.0
        %974 = vmatprep.subr.mxu0 0.0
        %975 = vmatpush2.msra.mxu0 0.0
        %976 = vmatprep.subr.mxu0 0.0
        %977 = vmatpush2.msra.mxu0 0.0
        %978 = vmatprep.subr.mxu0 0.0
        %979 = vmatpush2.msra.mxu0 0.0
        %980 = vmatprep.subr.mxu0 0.0
        %981 = vmatpush2.msra.mxu0 0.0
        %982 = vmatprep.subr.mxu0 0.0
        %983 = vmatpush2.msra.mxu0 0.0
        %984 = vmatprep.mubr.f32.mxu0 0.0
        %v985 = vand.u32 %v756, 4294901760
        %v986 = vsub.f32 %v756, %v985
        %987 = vmatmul.mubr.f32.gmra.mxu0 %v986
        %v988 = vpop.f32.mrf.mxu0
        %v989 = vadd.f32 %v913, %v988
        %v990 = vpop.f32.mrf.mxu0
        %991 = vdwg.mxu0
        %992 = vmatprep.subr.mxu0 0.0
        %993 = vmatpush1.msra.mxu0 0.0
        %994 = vmatprep.subr.mxu0 0.0
        %995 = vmatpush1.msra.mxu0 0.0
        %996 = vmatprep.subr.mxu0 0.0
        %997 = vmatpush1.msra.mxu0 0.0
        %998 = vmatprep.subr.mxu0 0.0
        %999 = vmatpush1.msra.mxu0 0.0
        %1000 = vmatprep.subr.mxu0 0.0
        %1001 = vmatpush1.msra.mxu0 0.0
        %1002 = vmatprep.subr.mxu0 0.0
        %1003 = vmatpush1.msra.mxu0 0.0
        %1004 = vmatprep.subr.mxu0 0.0
        %1005 = vmatpush1.msra.mxu0 0.0
        %1006 = vmatprep.subr.mxu0 0.0
        %1007 = vmatpush1.msra.mxu0 0.0
        %1008 = vmatprep.subr.mxu0 0.0
        %1009 = vmatpush1.msra.mxu0 0.0
        %1010 = vmatprep.subr.mxu0 0.0
        %1011 = vmatpush1.msra.mxu0 0.0
        %1012 = vmatprep.subr.mxu0 0.0
        %1013 = vmatpush1.msra.mxu0 0.0
        %1014 = vmatprep.subr.mxu0 0.0
        %1015 = vmatpush1.msra.mxu0 0.0
        %1016 = vmatprep.subr.mxu0 0.0
        %1017 = vmatpush1.msra.mxu0 0.0
        %1018 = vmatprep.subr.mxu0 0.0
        %1019 = vmatpush1.msra.mxu0 0.0
        %1020 = vmatprep.subr.mxu0 0.0
        %v1021 = vand.u32 %v258, 4294901760
        %1022 = vmatpush1.msra.mxu0 %v1021
        %1023 = vmatprep.subr.mxu0 0.0
        %v1024 = vand.u32 %v257, 4294901760
        %1025 = vmatpush1.msra.mxu0 %v1024
        %1026 = vmatprep.subr.mxu0 0.0
        %1027 = vmatpush2.msra.mxu0 0.0
        %1028 = vmatprep.subr.mxu0 0.0
        %1029 = vmatpush2.msra.mxu0 0.0
        %1030 = vmatprep.subr.mxu0 0.0
        %1031 = vmatpush2.msra.mxu0 0.0
        %1032 = vmatprep.subr.mxu0 0.0
        %1033 = vmatpush2.msra.mxu0 0.0
        %1034 = vmatprep.subr.mxu0 0.0
        %1035 = vmatpush2.msra.mxu0 0.0
        %1036 = vmatprep.subr.mxu0 0.0
        %1037 = vmatpush2.msra.mxu0 0.0
        %1038 = vmatprep.subr.mxu0 0.0
        %1039 = vmatpush2.msra.mxu0 0.0
        %1040 = vmatprep.subr.mxu0 0.0
        %1041 = vmatpush2.msra.mxu0 0.0
        %1042 = vmatprep.subr.mxu0 0.0
        %1043 = vmatpush2.msra.mxu0 0.0
        %1044 = vmatprep.subr.mxu0 0.0
        %1045 = vmatpush2.msra.mxu0 0.0
        %1046 = vmatprep.subr.mxu0 0.0
        %1047 = vmatpush2.msra.mxu0 0.0
        %1048 = vmatprep.subr.mxu0 0.0
        %1049 = vmatpush2.msra.mxu0 0.0
        %1050 = vmatprep.subr.mxu0 0.0
        %1051 = vmatpush2.msra.mxu0 0.0
        %1052 = vmatprep.subr.mxu0 0.0
        %1053 = vmatpush2.msra.mxu0 0.0
        %1054 = vmatprep.subr.mxu0 0.0
        %1055 = vmatpush2.msra.mxu0 0.0
        %1056 = vmatprep.subr.mxu0 0.0
        %1057 = vmatpush2.msra.mxu0 0.0
        %1058 = vmatprep.mubr.f32.mxu0 0.0
        %v1059 = vand.u32 %v756, 4294901760
        %v1060 = vsub.f32 %v756, %v1059
        %v1061 = vand.u32 %v1060, 4294901760
        %1062 = vmatmul.mubr.f32.gmra.mxu0 %v1061
        %v1063 = vpop.f32.mrf.mxu0
        %v1064 = vadd.f32 %v989, %v1063
        %v1065 = vpop.f32.mrf.mxu0
        %1066 = vdwg.mxu0
        %1067 = vmatprep.subr.mxu0 0.0
        %1068 = vmatpush1.msra.mxu0 0.0
        %1069 = vmatprep.subr.mxu0 0.0
        %1070 = vmatpush1.msra.mxu0 0.0
        %1071 = vmatprep.subr.mxu0 0.0
        %1072 = vmatpush1.msra.mxu0 0.0
        %1073 = vmatprep.subr.mxu0 0.0
        %1074 = vmatpush1.msra.mxu0 0.0
        %1075 = vmatprep.subr.mxu0 0.0
        %1076 = vmatpush1.msra.mxu0 0.0
        %1077 = vmatprep.subr.mxu0 0.0
        %1078 = vmatpush1.msra.mxu0 0.0
        %1079 = vmatprep.subr.mxu0 0.0
        %1080 = vmatpush1.msra.mxu0 0.0
        %1081 = vmatprep.subr.mxu0 0.0
        %1082 = vmatpush1.msra.mxu0 0.0
        %1083 = vmatprep.subr.mxu0 0.0
        %1084 = vmatpush1.msra.mxu0 0.0
        %1085 = vmatprep.subr.mxu0 0.0
        %1086 = vmatpush1.msra.mxu0 0.0
        %1087 = vmatprep.subr.mxu0 0.0
        %1088 = vmatpush1.msra.mxu0 0.0
        %1089 = vmatprep.subr.mxu0 0.0
        %1090 = vmatpush1.msra.mxu0 0.0
        %1091 = vmatprep.subr.mxu0 0.0
        %1092 = vmatpush1.msra.mxu0 0.0
        %1093 = vmatprep.subr.mxu0 0.0
        %1094 = vmatpush1.msra.mxu0 0.0
        %1095 = vmatprep.subr.mxu0 0.0
        %v1096 = vand.u32 %v258, 4294901760
        %v1097 = vsub.f32 %v258, %v1096
        %v1098 = vand.u32 %v1097, 4294901760
        %1099 = vmatpush1.msra.mxu0 %v1098
        %1100 = vmatprep.subr.mxu0 0.0
        %v1101 = vand.u32 %v257, 4294901760
        %v1102 = vsub.f32 %v257, %v1101
        %v1103 = vand.u32 %v1102, 4294901760
        %1104 = vmatpush1.msra.mxu0 %v1103
        %1105 = vmatprep.subr.mxu0 0.0
        %1106 = vmatpush2.msra.mxu0 0.0
        %1107 = vmatprep.subr.mxu0 0.0
        %1108 = vmatpush2.msra.mxu0 0.0
        %1109 = vmatprep.subr.mxu0 0.0
        %1110 = vmatpush2.msra.mxu0 0.0
        %1111 = vmatprep.subr.mxu0 0.0
        %1112 = vmatpush2.msra.mxu0 0.0
        %1113 = vmatprep.subr.mxu0 0.0
        %1114 = vmatpush2.msra.mxu0 0.0
        %1115 = vmatprep.subr.mxu0 0.0
        %1116 = vmatpush2.msra.mxu0 0.0
        %1117 = vmatprep.subr.mxu0 0.0
        %1118 = vmatpush2.msra.mxu0 0.0
        %1119 = vmatprep.subr.mxu0 0.0
        %1120 = vmatpush2.msra.mxu0 0.0
        %1121 = vmatprep.subr.mxu0 0.0
        %1122 = vmatpush2.msra.mxu0 0.0
        %1123 = vmatprep.subr.mxu0 0.0
        %1124 = vmatpush2.msra.mxu0 0.0
        %1125 = vmatprep.subr.mxu0 0.0
        %1126 = vmatpush2.msra.mxu0 0.0
        %1127 = vmatprep.subr.mxu0 0.0
        %1128 = vmatpush2.msra.mxu0 0.0
        %1129 = vmatprep.subr.mxu0 0.0
        %1130 = vmatpush2.msra.mxu0 0.0
        %1131 = vmatprep.subr.mxu0 0.0
        %1132 = vmatpush2.msra.mxu0 0.0
        %1133 = vmatprep.subr.mxu0 0.0
        %1134 = vmatpush2.msra.mxu0 0.0
        %1135 = vmatprep.subr.mxu0 0.0
        %1136 = vmatpush2.msra.mxu0 0.0
        %1137 = vmatprep.mubr.f32.mxu0 0.0
        %v1138 = vand.u32 %v756, 4294901760
        %1139 = vmatmul.mubr.f32.gmra.mxu0 %v1138
        %v1140 = vpop.f32.mrf.mxu0
        %v1141 = vadd.f32 %v1064, %v1140
        %v1142 = vpop.f32.mrf.mxu0
        %1143 = vdwg.mxu0
        %1144 = vmatprep.subr.mxu0 0.0
        %1145 = vmatpush1.msra.mxu0 0.0
        %1146 = vmatprep.subr.mxu0 0.0
        %1147 = vmatpush1.msra.mxu0 0.0
        %1148 = vmatprep.subr.mxu0 0.0
        %1149 = vmatpush1.msra.mxu0 0.0
        %1150 = vmatprep.subr.mxu0 0.0
        %1151 = vmatpush1.msra.mxu0 0.0
        %1152 = vmatprep.subr.mxu0 0.0
        %1153 = vmatpush1.msra.mxu0 0.0
        %1154 = vmatprep.subr.mxu0 0.0
        %1155 = vmatpush1.msra.mxu0 0.0
        %1156 = vmatprep.subr.mxu0 0.0
        %1157 = vmatpush1.msra.mxu0 0.0
        %1158 = vmatprep.subr.mxu0 0.0
        %1159 = vmatpush1.msra.mxu0 0.0
        %1160 = vmatprep.subr.mxu0 0.0
        %1161 = vmatpush1.msra.mxu0 0.0
        %1162 = vmatprep.subr.mxu0 0.0
        %1163 = vmatpush1.msra.mxu0 0.0
        %1164 = vmatprep.subr.mxu0 0.0
        %1165 = vmatpush1.msra.mxu0 0.0
        %1166 = vmatprep.subr.mxu0 0.0
        %1167 = vmatpush1.msra.mxu0 0.0
        %1168 = vmatprep.subr.mxu0 0.0
        %1169 = vmatpush1.msra.mxu0 0.0
        %1170 = vmatprep.subr.mxu0 0.0
        %1171 = vmatpush1.msra.mxu0 0.0
        %1172 = vmatprep.subr.mxu0 0.0
        %v1173 = vand.u32 %v258, 4294901760
        %1174 = vmatpush1.msra.mxu0 %v1173
        %1175 = vmatprep.subr.mxu0 0.0
        %v1176 = vand.u32 %v257, 4294901760
        %1177 = vmatpush1.msra.mxu0 %v1176
        %1178 = vmatprep.subr.mxu0 0.0
        %1179 = vmatpush2.msra.mxu0 0.0
        %1180 = vmatprep.subr.mxu0 0.0
        %1181 = vmatpush2.msra.mxu0 0.0
        %1182 = vmatprep.subr.mxu0 0.0
        %1183 = vmatpush2.msra.mxu0 0.0
        %1184 = vmatprep.subr.mxu0 0.0
        %1185 = vmatpush2.msra.mxu0 0.0
        %1186 = vmatprep.subr.mxu0 0.0
        %1187 = vmatpush2.msra.mxu0 0.0
        %1188 = vmatprep.subr.mxu0 0.0
        %1189 = vmatpush2.msra.mxu0 0.0
        %1190 = vmatprep.subr.mxu0 0.0
        %1191 = vmatpush2.msra.mxu0 0.0
        %1192 = vmatprep.subr.mxu0 0.0
        %1193 = vmatpush2.msra.mxu0 0.0
        %1194 = vmatprep.subr.mxu0 0.0
        %1195 = vmatpush2.msra.mxu0 0.0
        %1196 = vmatprep.subr.mxu0 0.0
        %1197 = vmatpush2.msra.mxu0 0.0
        %1198 = vmatprep.subr.mxu0 0.0
        %1199 = vmatpush2.msra.mxu0 0.0
        %1200 = vmatprep.subr.mxu0 0.0
        %1201 = vmatpush2.msra.mxu0 0.0
        %1202 = vmatprep.subr.mxu0 0.0
        %1203 = vmatpush2.msra.mxu0 0.0
        %1204 = vmatprep.subr.mxu0 0.0
        %1205 = vmatpush2.msra.mxu0 0.0
        %1206 = vmatprep.subr.mxu0 0.0
        %1207 = vmatpush2.msra.mxu0 0.0
        %1208 = vmatprep.subr.mxu0 0.0
        %1209 = vmatpush2.msra.mxu0 0.0
        %1210 = vmatprep.mubr.f32.mxu0 0.0
        %v1211 = vand.u32 %v756, 4294901760
        %1212 = vmatmul.mubr.f32.gmra.mxu0 %v1211
        %v1213 = vpop.f32.mrf.mxu0
        %v1214 = vadd.f32 %v1141, %v1213
        %v1215 = vpop.f32.mrf.mxu0
        %1216 = vdwg.mxu0
        %v1217 = vld [vmem:[%s226] sm:$0xff]
        %v1218 = vld [vmem:[%s226 + $0x8] sm:$0xff]
        %v1219 = vld [vmem:[%s226 + $0x10] sm:$0xff]
        %v1220 = vld [vmem:[%s226 + $0x18] sm:$0xff]
        %v1221 = vld [vmem:[%s226 + $0x20] sm:$0xff]
        %v1222 = vld [vmem:[%s226 + $0x28] sm:$0xff]
        %v1223 = vld [vmem:[%s226 + $0x30] sm:$0xff]
        %v1224 = vld [vmem:[%s226 + $0x38] sm:$0xff]
        %v1225 = vsel %vm275, %v1217, 0.0
        %v1226 = vsel %vm275, %v1219, 0.0
        %v1227 = vadd.f32 %v1225, %v1226
        %v1228 = vsel %vm275, %v1221, 0.0
        %v1229 = vadd.f32 %v1227, %v1228
        %v1230 = vsel %vm275, %v1223, 0.0
        %v1231 = vadd.f32 %v1229, %v1230
        %v1232 = vsel %vm275, %v1218, 0.0
        %v1233 = vsel %vm275, %v1220, 0.0
        %v1234 = vadd.f32 %v1232, %v1233
        %v1235 = vsel %vm275, %v1222, 0.0
        %v1236 = vadd.f32 %v1234, %v1235
        %v1237 = vsel %vm275, %v1224, 0.0
        %v1238 = vadd.f32 %v1236, %v1237
        %v1239 = vmul.f32 %v1231, %v290
        %v1240 = vmul.f32 %v1238, %v290
        %1241 = vmatprep.subr.mxu0 0.0
        %1242 = vmatpush1.msra.mxu0 0.0
        %1243 = vmatprep.subr.mxu0 0.0
        %1244 = vmatpush1.msra.mxu0 0.0
        %1245 = vmatprep.subr.mxu0 0.0
        %1246 = vmatpush1.msra.mxu0 0.0
        %1247 = vmatprep.subr.mxu0 0.0
        %1248 = vmatpush1.msra.mxu0 0.0
        %1249 = vmatprep.subr.mxu0 0.0
        %1250 = vmatpush1.msra.mxu0 0.0
        %1251 = vmatprep.subr.mxu0 0.0
        %1252 = vmatpush1.msra.mxu0 0.0
        %1253 = vmatprep.subr.mxu0 0.0
        %1254 = vmatpush1.msra.mxu0 0.0
        %1255 = vmatprep.subr.mxu0 0.0
        %1256 = vmatpush1.msra.mxu0 0.0
        %1257 = vmatprep.subr.mxu0 0.0
        %1258 = vmatpush1.msra.mxu0 0.0
        %1259 = vmatprep.subr.mxu0 0.0
        %1260 = vmatpush1.msra.mxu0 0.0
        %1261 = vmatprep.subr.mxu0 0.0
        %1262 = vmatpush1.msra.mxu0 0.0
        %1263 = vmatprep.subr.mxu0 0.0
        %1264 = vmatpush1.msra.mxu0 0.0
        %1265 = vmatprep.subr.mxu0 0.0
        %1266 = vmatpush1.msra.mxu0 0.0
        %1267 = vmatprep.subr.mxu0 0.0
        %1268 = vmatpush1.msra.mxu0 0.0
        %1269 = vmatprep.subr.mxu0 0.0
        %v1270 = vand.u32 %v1240, 4294901760
        %1271 = vmatpush1.msra.mxu0 %v1270
        %1272 = vmatprep.subr.mxu0 0.0
        %v1273 = vand.u32 %v1239, 4294901760
        %1274 = vmatpush1.msra.mxu0 %v1273
        %1275 = vmatprep.subr.mxu0 0.0
        %1276 = vmatpush2.msra.mxu0 0.0
        %1277 = vmatprep.subr.mxu0 0.0
        %1278 = vmatpush2.msra.mxu0 0.0
        %1279 = vmatprep.subr.mxu0 0.0
        %1280 = vmatpush2.msra.mxu0 0.0
        %1281 = vmatprep.subr.mxu0 0.0
        %1282 = vmatpush2.msra.mxu0 0.0
        %1283 = vmatprep.subr.mxu0 0.0
        %1284 = vmatpush2.msra.mxu0 0.0
        %1285 = vmatprep.subr.mxu0 0.0
        %1286 = vmatpush2.msra.mxu0 0.0
        %1287 = vmatprep.subr.mxu0 0.0
        %1288 = vmatpush2.msra.mxu0 0.0
        %1289 = vmatprep.subr.mxu0 0.0
        %1290 = vmatpush2.msra.mxu0 0.0
        %1291 = vmatprep.subr.mxu0 0.0
        %1292 = vmatpush2.msra.mxu0 0.0
        %1293 = vmatprep.subr.mxu0 0.0
        %1294 = vmatpush2.msra.mxu0 0.0
        %1295 = vmatprep.subr.mxu0 0.0
        %1296 = vmatpush2.msra.mxu0 0.0
        %1297 = vmatprep.subr.mxu0 0.0
        %1298 = vmatpush2.msra.mxu0 0.0
        %1299 = vmatprep.subr.mxu0 0.0
        %1300 = vmatpush2.msra.mxu0 0.0
        %1301 = vmatprep.subr.mxu0 0.0
        %1302 = vmatpush2.msra.mxu0 0.0
        %1303 = vmatprep.subr.mxu0 0.0
        %1304 = vmatpush2.msra.mxu0 0.0
        %1305 = vmatprep.subr.mxu0 0.0
        %1306 = vmatpush2.msra.mxu0 0.0
        %1307 = vmatprep.mubr.f32.mxu0 0.0
        %v1308 = vand.u32 %v294, 4294901760
        %v1309 = vsub.f32 %v294, %v1308
        %v1310 = vand.u32 %v1309, 4294901760
        %v1311 = vsub.f32 %v1309, %v1310
        %v1312 = vand.u32 %v1311, 4294901760
        %1313 = vmatmul.mubr.f32.gmra.mxu0 %v1312
        %v1314 = vpop.f32.mrf.mxu0
        %v1315 = vadd.f32 0.0, %v1314
        %v1316 = vpop.f32.mrf.mxu0
        %1317 = vdwg.mxu0
        %1318 = vmatprep.subr.mxu0 0.0
        %1319 = vmatpush1.msra.mxu0 0.0
        %1320 = vmatprep.subr.mxu0 0.0
        %1321 = vmatpush1.msra.mxu0 0.0
        %1322 = vmatprep.subr.mxu0 0.0
        %1323 = vmatpush1.msra.mxu0 0.0
        %1324 = vmatprep.subr.mxu0 0.0
        %1325 = vmatpush1.msra.mxu0 0.0
        %1326 = vmatprep.subr.mxu0 0.0
        %1327 = vmatpush1.msra.mxu0 0.0
        %1328 = vmatprep.subr.mxu0 0.0
        %1329 = vmatpush1.msra.mxu0 0.0
        %1330 = vmatprep.subr.mxu0 0.0
        %1331 = vmatpush1.msra.mxu0 0.0
        %1332 = vmatprep.subr.mxu0 0.0
        %1333 = vmatpush1.msra.mxu0 0.0
        %1334 = vmatprep.subr.mxu0 0.0
        %1335 = vmatpush1.msra.mxu0 0.0
        %1336 = vmatprep.subr.mxu0 0.0
        %1337 = vmatpush1.msra.mxu0 0.0
        %1338 = vmatprep.subr.mxu0 0.0
        %1339 = vmatpush1.msra.mxu0 0.0
        %1340 = vmatprep.subr.mxu0 0.0
        %1341 = vmatpush1.msra.mxu0 0.0
        %1342 = vmatprep.subr.mxu0 0.0
        %1343 = vmatpush1.msra.mxu0 0.0
        %1344 = vmatprep.subr.mxu0 0.0
        %1345 = vmatpush1.msra.mxu0 0.0
        %1346 = vmatprep.subr.mxu0 0.0
        %v1347 = vand.u32 %v1240, 4294901760
        %v1348 = vsub.f32 %v1240, %v1347
        %v1349 = vand.u32 %v1348, 4294901760
        %v1350 = vsub.f32 %v1348, %v1349
        %v1351 = vand.u32 %v1350, 4294901760
        %1352 = vmatpush1.msra.mxu0 %v1351
        %1353 = vmatprep.subr.mxu0 0.0
        %v1354 = vand.u32 %v1239, 4294901760
        %v1355 = vsub.f32 %v1239, %v1354
        %v1356 = vand.u32 %v1355, 4294901760
        %v1357 = vsub.f32 %v1355, %v1356
        %v1358 = vand.u32 %v1357, 4294901760
        %1359 = vmatpush1.msra.mxu0 %v1358
        %1360 = vmatprep.subr.mxu0 0.0
        %1361 = vmatpush2.msra.mxu0 0.0
        %1362 = vmatprep.subr.mxu0 0.0
        %1363 = vmatpush2.msra.mxu0 0.0
        %1364 = vmatprep.subr.mxu0 0.0
        %1365 = vmatpush2.msra.mxu0 0.0
        %1366 = vmatprep.subr.mxu0 0.0
        %1367 = vmatpush2.msra.mxu0 0.0
        %1368 = vmatprep.subr.mxu0 0.0
        %1369 = vmatpush2.msra.mxu0 0.0
        %1370 = vmatprep.subr.mxu0 0.0
        %1371 = vmatpush2.msra.mxu0 0.0
        %1372 = vmatprep.subr.mxu0 0.0
        %1373 = vmatpush2.msra.mxu0 0.0
        %1374 = vmatprep.subr.mxu0 0.0
        %1375 = vmatpush2.msra.mxu0 0.0
        %1376 = vmatprep.subr.mxu0 0.0
        %1377 = vmatpush2.msra.mxu0 0.0
        %1378 = vmatprep.subr.mxu0 0.0
        %1379 = vmatpush2.msra.mxu0 0.0
        %1380 = vmatprep.subr.mxu0 0.0
        %1381 = vmatpush2.msra.mxu0 0.0
        %1382 = vmatprep.subr.mxu0 0.0
        %1383 = vmatpush2.msra.mxu0 0.0
        %1384 = vmatprep.subr.mxu0 0.0
        %1385 = vmatpush2.msra.mxu0 0.0
        %1386 = vmatprep.subr.mxu0 0.0
        %1387 = vmatpush2.msra.mxu0 0.0
        %1388 = vmatprep.subr.mxu0 0.0
        %1389 = vmatpush2.msra.mxu0 0.0
        %1390 = vmatprep.subr.mxu0 0.0
        %1391 = vmatpush2.msra.mxu0 0.0
        %1392 = vmatprep.mubr.f32.mxu0 0.0
        %v1393 = vand.u32 %v294, 4294901760
        %1394 = vmatmul.mubr.f32.gmra.mxu0 %v1393
        %v1395 = vpop.f32.mrf.mxu0
        %v1396 = vadd.f32 %v1315, %v1395
        %v1397 = vpop.f32.mrf.mxu0
        %1398 = vdwg.mxu0
        %1399 = vmatprep.subr.mxu0 0.0
        %1400 = vmatpush1.msra.mxu0 0.0
        %1401 = vmatprep.subr.mxu0 0.0
        %1402 = vmatpush1.msra.mxu0 0.0
        %1403 = vmatprep.subr.mxu0 0.0
        %1404 = vmatpush1.msra.mxu0 0.0
        %1405 = vmatprep.subr.mxu0 0.0
        %1406 = vmatpush1.msra.mxu0 0.0
        %1407 = vmatprep.subr.mxu0 0.0
        %1408 = vmatpush1.msra.mxu0 0.0
        %1409 = vmatprep.subr.mxu0 0.0
        %1410 = vmatpush1.msra.mxu0 0.0
        %1411 = vmatprep.subr.mxu0 0.0
        %1412 = vmatpush1.msra.mxu0 0.0
        %1413 = vmatprep.subr.mxu0 0.0
        %1414 = vmatpush1.msra.mxu0 0.0
        %1415 = vmatprep.subr.mxu0 0.0
        %1416 = vmatpush1.msra.mxu0 0.0
        %1417 = vmatprep.subr.mxu0 0.0
        %1418 = vmatpush1.msra.mxu0 0.0
        %1419 = vmatprep.subr.mxu0 0.0
        %1420 = vmatpush1.msra.mxu0 0.0
        %1421 = vmatprep.subr.mxu0 0.0
        %1422 = vmatpush1.msra.mxu0 0.0
        %1423 = vmatprep.subr.mxu0 0.0
        %1424 = vmatpush1.msra.mxu0 0.0
        %1425 = vmatprep.subr.mxu0 0.0
        %1426 = vmatpush1.msra.mxu0 0.0
        %1427 = vmatprep.subr.mxu0 0.0
        %v1428 = vand.u32 %v1240, 4294901760
        %v1429 = vsub.f32 %v1240, %v1428
        %1430 = vmatpush1.msra.mxu0 %v1429
        %1431 = vmatprep.subr.mxu0 0.0
        %v1432 = vand.u32 %v1239, 4294901760
        %v1433 = vsub.f32 %v1239, %v1432
        %1434 = vmatpush1.msra.mxu0 %v1433
        %1435 = vmatprep.subr.mxu0 0.0
        %1436 = vmatpush2.msra.mxu0 0.0
        %1437 = vmatprep.subr.mxu0 0.0
        %1438 = vmatpush2.msra.mxu0 0.0
        %1439 = vmatprep.subr.mxu0 0.0
        %1440 = vmatpush2.msra.mxu0 0.0
        %1441 = vmatprep.subr.mxu0 0.0
        %1442 = vmatpush2.msra.mxu0 0.0
        %1443 = vmatprep.subr.mxu0 0.0
        %1444 = vmatpush2.msra.mxu0 0.0
        %1445 = vmatprep.subr.mxu0 0.0
        %1446 = vmatpush2.msra.mxu0 0.0
        %1447 = vmatprep.subr.mxu0 0.0
        %1448 = vmatpush2.msra.mxu0 0.0
        %1449 = vmatprep.subr.mxu0 0.0
        %1450 = vmatpush2.msra.mxu0 0.0
        %1451 = vmatprep.subr.mxu0 0.0
        %1452 = vmatpush2.msra.mxu0 0.0
        %1453 = vmatprep.subr.mxu0 0.0
        %1454 = vmatpush2.msra.mxu0 0.0
        %1455 = vmatprep.subr.mxu0 0.0
        %1456 = vmatpush2.msra.mxu0 0.0
        %1457 = vmatprep.subr.mxu0 0.0
        %1458 = vmatpush2.msra.mxu0 0.0
        %1459 = vmatprep.subr.mxu0 0.0
        %1460 = vmatpush2.msra.mxu0 0.0
        %1461 = vmatprep.subr.mxu0 0.0
        %1462 = vmatpush2.msra.mxu0 0.0
        %1463 = vmatprep.subr.mxu0 0.0
        %1464 = vmatpush2.msra.mxu0 0.0
        %1465 = vmatprep.subr.mxu0 0.0
        %1466 = vmatpush2.msra.mxu0 0.0
        %1467 = vmatprep.mubr.f32.mxu0 0.0
        %v1468 = vand.u32 %v294, 4294901760
        %v1469 = vsub.f32 %v294, %v1468
        %1470 = vmatmul.mubr.f32.gmra.mxu0 %v1469
        %v1471 = vpop.f32.mrf.mxu0
        %v1472 = vadd.f32 %v1396, %v1471
        %v1473 = vpop.f32.mrf.mxu0
        %1474 = vdwg.mxu0
        %1475 = vmatprep.subr.mxu0 0.0
        %1476 = vmatpush1.msra.mxu0 0.0
        %1477 = vmatprep.subr.mxu0 0.0
        %1478 = vmatpush1.msra.mxu0 0.0
        %1479 = vmatprep.subr.mxu0 0.0
        %1480 = vmatpush1.msra.mxu0 0.0
        %1481 = vmatprep.subr.mxu0 0.0
        %1482 = vmatpush1.msra.mxu0 0.0
        %1483 = vmatprep.subr.mxu0 0.0
        %1484 = vmatpush1.msra.mxu0 0.0
        %1485 = vmatprep.subr.mxu0 0.0
        %1486 = vmatpush1.msra.mxu0 0.0
        %1487 = vmatprep.subr.mxu0 0.0
        %1488 = vmatpush1.msra.mxu0 0.0
        %1489 = vmatprep.subr.mxu0 0.0
        %1490 = vmatpush1.msra.mxu0 0.0
        %1491 = vmatprep.subr.mxu0 0.0
        %1492 = vmatpush1.msra.mxu0 0.0
        %1493 = vmatprep.subr.mxu0 0.0
        %1494 = vmatpush1.msra.mxu0 0.0
        %1495 = vmatprep.subr.mxu0 0.0
        %1496 = vmatpush1.msra.mxu0 0.0
        %1497 = vmatprep.subr.mxu0 0.0
        %1498 = vmatpush1.msra.mxu0 0.0
        %1499 = vmatprep.subr.mxu0 0.0
        %1500 = vmatpush1.msra.mxu0 0.0
        %1501 = vmatprep.subr.mxu0 0.0
        %1502 = vmatpush1.msra.mxu0 0.0
        %1503 = vmatprep.subr.mxu0 0.0
        %v1504 = vand.u32 %v1240, 4294901760
        %1505 = vmatpush1.msra.mxu0 %v1504
        %1506 = vmatprep.subr.mxu0 0.0
        %v1507 = vand.u32 %v1239, 4294901760
        %1508 = vmatpush1.msra.mxu0 %v1507
        %1509 = vmatprep.subr.mxu0 0.0
        %1510 = vmatpush2.msra.mxu0 0.0
        %1511 = vmatprep.subr.mxu0 0.0
        %1512 = vmatpush2.msra.mxu0 0.0
        %1513 = vmatprep.subr.mxu0 0.0
        %1514 = vmatpush2.msra.mxu0 0.0
        %1515 = vmatprep.subr.mxu0 0.0
        %1516 = vmatpush2.msra.mxu0 0.0
        %1517 = vmatprep.subr.mxu0 0.0
        %1518 = vmatpush2.msra.mxu0 0.0
        %1519 = vmatprep.subr.mxu0 0.0
        %1520 = vmatpush2.msra.mxu0 0.0
        %1521 = vmatprep.subr.mxu0 0.0
        %1522 = vmatpush2.msra.mxu0 0.0
        %1523 = vmatprep.subr.mxu0 0.0
        %1524 = vmatpush2.msra.mxu0 0.0
        %1525 = vmatprep.subr.mxu0 0.0
        %1526 = vmatpush2.msra.mxu0 0.0
        %1527 = vmatprep.subr.mxu0 0.0
        %1528 = vmatpush2.msra.mxu0 0.0
        %1529 = vmatprep.subr.mxu0 0.0
        %1530 = vmatpush2.msra.mxu0 0.0
        %1531 = vmatprep.subr.mxu0 0.0
        %1532 = vmatpush2.msra.mxu0 0.0
        %1533 = vmatprep.subr.mxu0 0.0
        %1534 = vmatpush2.msra.mxu0 0.0
        %1535 = vmatprep.subr.mxu0 0.0
        %1536 = vmatpush2.msra.mxu0 0.0
        %1537 = vmatprep.subr.mxu0 0.0
        %1538 = vmatpush2.msra.mxu0 0.0
        %1539 = vmatprep.subr.mxu0 0.0
        %1540 = vmatpush2.msra.mxu0 0.0
        %1541 = vmatprep.mubr.f32.mxu0 0.0
        %v1542 = vand.u32 %v294, 4294901760
        %v1543 = vsub.f32 %v294, %v1542
        %v1544 = vand.u32 %v1543, 4294901760
        %1545 = vmatmul.mubr.f32.gmra.mxu0 %v1544
        %v1546 = vpop.f32.mrf.mxu0
        %v1547 = vadd.f32 %v1472, %v1546
        %v1548 = vpop.f32.mrf.mxu0
        %1549 = vdwg.mxu0
        %1550 = vmatprep.subr.mxu0 0.0
        %1551 = vmatpush1.msra.mxu0 0.0
        %1552 = vmatprep.subr.mxu0 0.0
        %1553 = vmatpush1.msra.mxu0 0.0
        %1554 = vmatprep.subr.mxu0 0.0
        %1555 = vmatpush1.msra.mxu0 0.0
        %1556 = vmatprep.subr.mxu0 0.0
        %1557 = vmatpush1.msra.mxu0 0.0
        %1558 = vmatprep.subr.mxu0 0.0
        %1559 = vmatpush1.msra.mxu0 0.0
        %1560 = vmatprep.subr.mxu0 0.0
        %1561 = vmatpush1.msra.mxu0 0.0
        %1562 = vmatprep.subr.mxu0 0.0
        %1563 = vmatpush1.msra.mxu0 0.0
        %1564 = vmatprep.subr.mxu0 0.0
        %1565 = vmatpush1.msra.mxu0 0.0
        %1566 = vmatprep.subr.mxu0 0.0
        %1567 = vmatpush1.msra.mxu0 0.0
        %1568 = vmatprep.subr.mxu0 0.0
        %1569 = vmatpush1.msra.mxu0 0.0
        %1570 = vmatprep.subr.mxu0 0.0
        %1571 = vmatpush1.msra.mxu0 0.0
        %1572 = vmatprep.subr.mxu0 0.0
        %1573 = vmatpush1.msra.mxu0 0.0
        %1574 = vmatprep.subr.mxu0 0.0
        %1575 = vmatpush1.msra.mxu0 0.0
        %1576 = vmatprep.subr.mxu0 0.0
        %1577 = vmatpush1.msra.mxu0 0.0
        %1578 = vmatprep.subr.mxu0 0.0
        %v1579 = vand.u32 %v1240, 4294901760
        %v1580 = vsub.f32 %v1240, %v1579
        %v1581 = vand.u32 %v1580, 4294901760
        %1582 = vmatpush1.msra.mxu0 %v1581
        %1583 = vmatprep.subr.mxu0 0.0
        %v1584 = vand.u32 %v1239, 4294901760
        %v1585 = vsub.f32 %v1239, %v1584
        %v1586 = vand.u32 %v1585, 4294901760
        %1587 = vmatpush1.msra.mxu0 %v1586
        %1588 = vmatprep.subr.mxu0 0.0
        %1589 = vmatpush2.msra.mxu0 0.0
        %1590 = vmatprep.subr.mxu0 0.0
        %1591 = vmatpush2.msra.mxu0 0.0
        %1592 = vmatprep.subr.mxu0 0.0
        %1593 = vmatpush2.msra.mxu0 0.0
        %1594 = vmatprep.subr.mxu0 0.0
        %1595 = vmatpush2.msra.mxu0 0.0
        %1596 = vmatprep.subr.mxu0 0.0
        %1597 = vmatpush2.msra.mxu0 0.0
        %1598 = vmatprep.subr.mxu0 0.0
        %1599 = vmatpush2.msra.mxu0 0.0
        %1600 = vmatprep.subr.mxu0 0.0
        %1601 = vmatpush2.msra.mxu0 0.0
        %1602 = vmatprep.subr.mxu0 0.0
        %1603 = vmatpush2.msra.mxu0 0.0
        %1604 = vmatprep.subr.mxu0 0.0
        %1605 = vmatpush2.msra.mxu0 0.0
        %1606 = vmatprep.subr.mxu0 0.0
        %1607 = vmatpush2.msra.mxu0 0.0
        %1608 = vmatprep.subr.mxu0 0.0
        %1609 = vmatpush2.msra.mxu0 0.0
        %1610 = vmatprep.subr.mxu0 0.0
        %1611 = vmatpush2.msra.mxu0 0.0
        %1612 = vmatprep.subr.mxu0 0.0
        %1613 = vmatpush2.msra.mxu0 0.0
        %1614 = vmatprep.subr.mxu0 0.0
        %1615 = vmatpush2.msra.mxu0 0.0
        %1616 = vmatprep.subr.mxu0 0.0
        %1617 = vmatpush2.msra.mxu0 0.0
        %1618 = vmatprep.subr.mxu0 0.0
        %1619 = vmatpush2.msra.mxu0 0.0
        %1620 = vmatprep.mubr.f32.mxu0 0.0
        %v1621 = vand.u32 %v294, 4294901760
        %1622 = vmatmul.mubr.f32.gmra.mxu0 %v1621
        %v1623 = vpop.f32.mrf.mxu0
        %v1624 = vadd.f32 %v1547, %v1623
        %v1625 = vpop.f32.mrf.mxu0
        %1626 = vdwg.mxu0
        %1627 = vmatprep.subr.mxu0 0.0
        %1628 = vmatpush1.msra.mxu0 0.0
        %1629 = vmatprep.subr.mxu0 0.0
        %1630 = vmatpush1.msra.mxu0 0.0
        %1631 = vmatprep.subr.mxu0 0.0
        %1632 = vmatpush1.msra.mxu0 0.0
        %1633 = vmatprep.subr.mxu0 0.0
        %1634 = vmatpush1.msra.mxu0 0.0
        %1635 = vmatprep.subr.mxu0 0.0
        %1636 = vmatpush1.msra.mxu0 0.0
        %1637 = vmatprep.subr.mxu0 0.0
        %1638 = vmatpush1.msra.mxu0 0.0
        %1639 = vmatprep.subr.mxu0 0.0
        %1640 = vmatpush1.msra.mxu0 0.0
        %1641 = vmatprep.subr.mxu0 0.0
        %1642 = vmatpush1.msra.mxu0 0.0
        %1643 = vmatprep.subr.mxu0 0.0
        %1644 = vmatpush1.msra.mxu0 0.0
        %1645 = vmatprep.subr.mxu0 0.0
        %1646 = vmatpush1.msra.mxu0 0.0
        %1647 = vmatprep.subr.mxu0 0.0
        %1648 = vmatpush1.msra.mxu0 0.0
        %1649 = vmatprep.subr.mxu0 0.0
        %1650 = vmatpush1.msra.mxu0 0.0
        %1651 = vmatprep.subr.mxu0 0.0
        %1652 = vmatpush1.msra.mxu0 0.0
        %1653 = vmatprep.subr.mxu0 0.0
        %1654 = vmatpush1.msra.mxu0 0.0
        %1655 = vmatprep.subr.mxu0 0.0
        %v1656 = vand.u32 %v1240, 4294901760
        %1657 = vmatpush1.msra.mxu0 %v1656
        %1658 = vmatprep.subr.mxu0 0.0
        %v1659 = vand.u32 %v1239, 4294901760
        %1660 = vmatpush1.msra.mxu0 %v1659
        %1661 = vmatprep.subr.mxu0 0.0
        %1662 = vmatpush2.msra.mxu0 0.0
        %1663 = vmatprep.subr.mxu0 0.0
        %1664 = vmatpush2.msra.mxu0 0.0
        %1665 = vmatprep.subr.mxu0 0.0
        %1666 = vmatpush2.msra.mxu0 0.0
        %1667 = vmatprep.subr.mxu0 0.0
        %1668 = vmatpush2.msra.mxu0 0.0
        %1669 = vmatprep.subr.mxu0 0.0
        %1670 = vmatpush2.msra.mxu0 0.0
        %1671 = vmatprep.subr.mxu0 0.0
        %1672 = vmatpush2.msra.mxu0 0.0
        %1673 = vmatprep.subr.mxu0 0.0
        %1674 = vmatpush2.msra.mxu0 0.0
        %1675 = vmatprep.subr.mxu0 0.0
        %1676 = vmatpush2.msra.mxu0 0.0
        %1677 = vmatprep.subr.mxu0 0.0
        %1678 = vmatpush2.msra.mxu0 0.0
        %1679 = vmatprep.subr.mxu0 0.0
        %1680 = vmatpush2.msra.mxu0 0.0
        %1681 = vmatprep.subr.mxu0 0.0
        %1682 = vmatpush2.msra.mxu0 0.0
        %1683 = vmatprep.subr.mxu0 0.0
        %1684 = vmatpush2.msra.mxu0 0.0
        %1685 = vmatprep.subr.mxu0 0.0
        %1686 = vmatpush2.msra.mxu0 0.0
        %1687 = vmatprep.subr.mxu0 0.0
        %1688 = vmatpush2.msra.mxu0 0.0
        %1689 = vmatprep.subr.mxu0 0.0
        %1690 = vmatpush2.msra.mxu0 0.0
        %1691 = vmatprep.subr.mxu0 0.0
        %1692 = vmatpush2.msra.mxu0 0.0
        %1693 = vmatprep.mubr.f32.mxu0 0.0
        %v1694 = vand.u32 %v294, 4294901760
        %1695 = vmatmul.mubr.f32.gmra.mxu0 %v1694
        %v1696 = vpop.f32.mrf.mxu0
        %v1697 = vadd.f32 %v1624, %v1696
        %v1698 = vpop.f32.mrf.mxu0
        %1699 = vdwg.mxu0
        %v1701 = vsel %vm275, %v1697, 0
        %1703 = vmatprep.subr.mxu0 0.0
        %1704 = vmatpush1.msra.mxu0 0.0
        %1705 = vmatprep.subr.mxu0 0.0
        %1706 = vmatpush1.msra.mxu0 0.0
        %1707 = vmatprep.subr.mxu0 0.0
        %1708 = vmatpush1.msra.mxu0 0.0
        %1709 = vmatprep.subr.mxu0 0.0
        %1710 = vmatpush1.msra.mxu0 0.0
        %1711 = vmatprep.subr.mxu0 0.0
        %1712 = vmatpush1.msra.mxu0 0.0
        %1713 = vmatprep.subr.mxu0 0.0
        %1714 = vmatpush1.msra.mxu0 0.0
        %1715 = vmatprep.subr.mxu0 0.0
        %1716 = vmatpush1.msra.mxu0 0.0
        %1717 = vmatprep.subr.mxu0 0.0
        %1718 = vmatpush1.msra.mxu0 0.0
        %1719 = vmatprep.subr.mxu0 0.0
        %1720 = vmatpush1.msra.mxu0 0.0
        %1721 = vmatprep.subr.mxu0 0.0
        %1722 = vmatpush1.msra.mxu0 0.0
        %1723 = vmatprep.subr.mxu0 0.0
        %1724 = vmatpush1.msra.mxu0 0.0
        %1725 = vmatprep.subr.mxu0 0.0
        %1726 = vmatpush1.msra.mxu0 0.0
        %1727 = vmatprep.subr.mxu0 0.0
        %1728 = vmatpush1.msra.mxu0 0.0
        %1729 = vmatprep.subr.mxu0 0.0
        %1730 = vmatpush1.msra.mxu0 0.0
        %1731 = vmatprep.subr.mxu0 0.0
        %v1732 = vand.u32 %v258, 4294901760
        %1733 = vmatpush1.msra.mxu0 %v1732
        %1734 = vmatprep.subr.mxu0 0.0
        %v1735 = vand.u32 %v257, 4294901760
        %1736 = vmatpush1.msra.mxu0 %v1735
        %1737 = vmatprep.subr.mxu0 0.0
        %1738 = vmatpush2.msra.mxu0 0.0
        %1739 = vmatprep.subr.mxu0 0.0
        %1740 = vmatpush2.msra.mxu0 0.0
        %1741 = vmatprep.subr.mxu0 0.0
        %1742 = vmatpush2.msra.mxu0 0.0
        %1743 = vmatprep.subr.mxu0 0.0
        %1744 = vmatpush2.msra.mxu0 0.0
        %1745 = vmatprep.subr.mxu0 0.0
        %1746 = vmatpush2.msra.mxu0 0.0
        %1747 = vmatprep.subr.mxu0 0.0
        %1748 = vmatpush2.msra.mxu0 0.0
        %1749 = vmatprep.subr.mxu0 0.0
        %1750 = vmatpush2.msra.mxu0 0.0
        %1751 = vmatprep.subr.mxu0 0.0
        %1752 = vmatpush2.msra.mxu0 0.0
        %1753 = vmatprep.subr.mxu0 0.0
        %1754 = vmatpush2.msra.mxu0 0.0
        %1755 = vmatprep.subr.mxu0 0.0
        %1756 = vmatpush2.msra.mxu0 0.0
        %1757 = vmatprep.subr.mxu0 0.0
        %1758 = vmatpush2.msra.mxu0 0.0
        %1759 = vmatprep.subr.mxu0 0.0
        %1760 = vmatpush2.msra.mxu0 0.0
        %1761 = vmatprep.subr.mxu0 0.0
        %1762 = vmatpush2.msra.mxu0 0.0
        %1763 = vmatprep.subr.mxu0 0.0
        %1764 = vmatpush2.msra.mxu0 0.0
        %1765 = vmatprep.subr.mxu0 0.0
        %1766 = vmatpush2.msra.mxu0 0.0
        %1767 = vmatprep.subr.mxu0 0.0
        %1768 = vmatpush2.msra.mxu0 0.0
        %1769 = vmatprep.mubr.f32.mxu0 0.0
        %v1770 = vand.u32 %v1701, 4294901760
        %v1771 = vsub.f32 %v1701, %v1770
        %v1772 = vand.u32 %v1771, 4294901760
        %v1773 = vsub.f32 %v1771, %v1772
        %v1774 = vand.u32 %v1773, 4294901760
        %1775 = vmatmul.mubr.f32.gmra.mxu0 %v1774
        %v1776 = vpop.f32.mrf.mxu0
        %v1777 = vadd.f32 0.0, %v1776
        %v1778 = vpop.f32.mrf.mxu0
        %1779 = vdwg.mxu0
        %1780 = vmatprep.subr.mxu0 0.0
        %1781 = vmatpush1.msra.mxu0 0.0
        %1782 = vmatprep.subr.mxu0 0.0
        %1783 = vmatpush1.msra.mxu0 0.0
        %1784 = vmatprep.subr.mxu0 0.0
        %1785 = vmatpush1.msra.mxu0 0.0
        %1786 = vmatprep.subr.mxu0 0.0
        %1787 = vmatpush1.msra.mxu0 0.0
        %1788 = vmatprep.subr.mxu0 0.0
        %1789 = vmatpush1.msra.mxu0 0.0
        %1790 = vmatprep.subr.mxu0 0.0
        %1791 = vmatpush1.msra.mxu0 0.0
        %1792 = vmatprep.subr.mxu0 0.0
        %1793 = vmatpush1.msra.mxu0 0.0
        %1794 = vmatprep.subr.mxu0 0.0
        %1795 = vmatpush1.msra.mxu0 0.0
        %1796 = vmatprep.subr.mxu0 0.0
        %1797 = vmatpush1.msra.mxu0 0.0
        %1798 = vmatprep.subr.mxu0 0.0
        %1799 = vmatpush1.msra.mxu0 0.0
        %1800 = vmatprep.subr.mxu0 0.0
        %1801 = vmatpush1.msra.mxu0 0.0
        %1802 = vmatprep.subr.mxu0 0.0
        %1803 = vmatpush1.msra.mxu0 0.0
        %1804 = vmatprep.subr.mxu0 0.0
        %1805 = vmatpush1.msra.mxu0 0.0
        %1806 = vmatprep.subr.mxu0 0.0
        %1807 = vmatpush1.msra.mxu0 0.0
        %1808 = vmatprep.subr.mxu0 0.0
        %v1809 = vand.u32 %v258, 4294901760
        %v1810 = vsub.f32 %v258, %v1809
        %v1811 = vand.u32 %v1810, 4294901760
        %v1812 = vsub.f32 %v1810, %v1811
        %v1813 = vand.u32 %v1812, 4294901760
        %1814 = vmatpush1.msra.mxu0 %v1813
        %1815 = vmatprep.subr.mxu0 0.0
        %v1816 = vand.u32 %v257, 4294901760
        %v1817 = vsub.f32 %v257, %v1816
        %v1818 = vand.u32 %v1817, 4294901760
        %v1819 = vsub.f32 %v1817, %v1818
        %v1820 = vand.u32 %v1819, 4294901760
        %1821 = vmatpush1.msra.mxu0 %v1820
        %1822 = vmatprep.subr.mxu0 0.0
        %1823 = vmatpush2.msra.mxu0 0.0
        %1824 = vmatprep.subr.mxu0 0.0
        %1825 = vmatpush2.msra.mxu0 0.0
        %1826 = vmatprep.subr.mxu0 0.0
        %1827 = vmatpush2.msra.mxu0 0.0
        %1828 = vmatprep.subr.mxu0 0.0
        %1829 = vmatpush2.msra.mxu0 0.0
        %1830 = vmatprep.subr.mxu0 0.0
        %1831 = vmatpush2.msra.mxu0 0.0
        %1832 = vmatprep.subr.mxu0 0.0
        %1833 = vmatpush2.msra.mxu0 0.0
        %1834 = vmatprep.subr.mxu0 0.0
        %1835 = vmatpush2.msra.mxu0 0.0
        %1836 = vmatprep.subr.mxu0 0.0
        %1837 = vmatpush2.msra.mxu0 0.0
        %1838 = vmatprep.subr.mxu0 0.0
        %1839 = vmatpush2.msra.mxu0 0.0
        %1840 = vmatprep.subr.mxu0 0.0
        %1841 = vmatpush2.msra.mxu0 0.0
        %1842 = vmatprep.subr.mxu0 0.0
        %1843 = vmatpush2.msra.mxu0 0.0
        %1844 = vmatprep.subr.mxu0 0.0
        %1845 = vmatpush2.msra.mxu0 0.0
        %1846 = vmatprep.subr.mxu0 0.0
        %1847 = vmatpush2.msra.mxu0 0.0
        %1848 = vmatprep.subr.mxu0 0.0
        %1849 = vmatpush2.msra.mxu0 0.0
        %1850 = vmatprep.subr.mxu0 0.0
        %1851 = vmatpush2.msra.mxu0 0.0
        %1852 = vmatprep.subr.mxu0 0.0
        %1853 = vmatpush2.msra.mxu0 0.0
        %1854 = vmatprep.mubr.f32.mxu0 0.0
        %v1855 = vand.u32 %v1701, 4294901760
        %1856 = vmatmul.mubr.f32.gmra.mxu0 %v1855
        %v1857 = vpop.f32.mrf.mxu0
        %v1858 = vadd.f32 %v1777, %v1857
        %v1859 = vpop.f32.mrf.mxu0
        %1860 = vdwg.mxu0
        %1861 = vmatprep.subr.mxu0 0.0
        %1862 = vmatpush1.msra.mxu0 0.0
        %1863 = vmatprep.subr.mxu0 0.0
        %1864 = vmatpush1.msra.mxu0 0.0
        %1865 = vmatprep.subr.mxu0 0.0
        %1866 = vmatpush1.msra.mxu0 0.0
        %1867 = vmatprep.subr.mxu0 0.0
        %1868 = vmatpush1.msra.mxu0 0.0
        %1869 = vmatprep.subr.mxu0 0.0
        %1870 = vmatpush1.msra.mxu0 0.0
        %1871 = vmatprep.subr.mxu0 0.0
        %1872 = vmatpush1.msra.mxu0 0.0
        %1873 = vmatprep.subr.mxu0 0.0
        %1874 = vmatpush1.msra.mxu0 0.0
        %1875 = vmatprep.subr.mxu0 0.0
        %1876 = vmatpush1.msra.mxu0 0.0
        %1877 = vmatprep.subr.mxu0 0.0
        %1878 = vmatpush1.msra.mxu0 0.0
        %1879 = vmatprep.subr.mxu0 0.0
        %1880 = vmatpush1.msra.mxu0 0.0
        %1881 = vmatprep.subr.mxu0 0.0
        %1882 = vmatpush1.msra.mxu0 0.0
        %1883 = vmatprep.subr.mxu0 0.0
        %1884 = vmatpush1.msra.mxu0 0.0
        %1885 = vmatprep.subr.mxu0 0.0
        %1886 = vmatpush1.msra.mxu0 0.0
        %1887 = vmatprep.subr.mxu0 0.0
        %1888 = vmatpush1.msra.mxu0 0.0
        %1889 = vmatprep.subr.mxu0 0.0
        %v1890 = vand.u32 %v258, 4294901760
        %v1891 = vsub.f32 %v258, %v1890
        %1892 = vmatpush1.msra.mxu0 %v1891
        %1893 = vmatprep.subr.mxu0 0.0
        %v1894 = vand.u32 %v257, 4294901760
        %v1895 = vsub.f32 %v257, %v1894
        %1896 = vmatpush1.msra.mxu0 %v1895
        %1897 = vmatprep.subr.mxu0 0.0
        %1898 = vmatpush2.msra.mxu0 0.0
        %1899 = vmatprep.subr.mxu0 0.0
        %1900 = vmatpush2.msra.mxu0 0.0
        %1901 = vmatprep.subr.mxu0 0.0
        %1902 = vmatpush2.msra.mxu0 0.0
        %1903 = vmatprep.subr.mxu0 0.0
        %1904 = vmatpush2.msra.mxu0 0.0
        %1905 = vmatprep.subr.mxu0 0.0
        %1906 = vmatpush2.msra.mxu0 0.0
        %1907 = vmatprep.subr.mxu0 0.0
        %1908 = vmatpush2.msra.mxu0 0.0
        %1909 = vmatprep.subr.mxu0 0.0
        %1910 = vmatpush2.msra.mxu0 0.0
        %1911 = vmatprep.subr.mxu0 0.0
        %1912 = vmatpush2.msra.mxu0 0.0
        %1913 = vmatprep.subr.mxu0 0.0
        %1914 = vmatpush2.msra.mxu0 0.0
        %1915 = vmatprep.subr.mxu0 0.0
        %1916 = vmatpush2.msra.mxu0 0.0
        %1917 = vmatprep.subr.mxu0 0.0
        %1918 = vmatpush2.msra.mxu0 0.0
        %1919 = vmatprep.subr.mxu0 0.0
        %1920 = vmatpush2.msra.mxu0 0.0
        %1921 = vmatprep.subr.mxu0 0.0
        %1922 = vmatpush2.msra.mxu0 0.0
        %1923 = vmatprep.subr.mxu0 0.0
        %1924 = vmatpush2.msra.mxu0 0.0
        %1925 = vmatprep.subr.mxu0 0.0
        %1926 = vmatpush2.msra.mxu0 0.0
        %1927 = vmatprep.subr.mxu0 0.0
        %1928 = vmatpush2.msra.mxu0 0.0
        %1929 = vmatprep.mubr.f32.mxu0 0.0
        %v1930 = vand.u32 %v1701, 4294901760
        %v1931 = vsub.f32 %v1701, %v1930
        %1932 = vmatmul.mubr.f32.gmra.mxu0 %v1931
        %v1933 = vpop.f32.mrf.mxu0
        %v1934 = vadd.f32 %v1858, %v1933
        %v1935 = vpop.f32.mrf.mxu0
        %1936 = vdwg.mxu0
        %1937 = vmatprep.subr.mxu0 0.0
        %1938 = vmatpush1.msra.mxu0 0.0
        %1939 = vmatprep.subr.mxu0 0.0
        %1940 = vmatpush1.msra.mxu0 0.0
        %1941 = vmatprep.subr.mxu0 0.0
        %1942 = vmatpush1.msra.mxu0 0.0
        %1943 = vmatprep.subr.mxu0 0.0
        %1944 = vmatpush1.msra.mxu0 0.0
        %1945 = vmatprep.subr.mxu0 0.0
        %1946 = vmatpush1.msra.mxu0 0.0
        %1947 = vmatprep.subr.mxu0 0.0
        %1948 = vmatpush1.msra.mxu0 0.0
        %1949 = vmatprep.subr.mxu0 0.0
        %1950 = vmatpush1.msra.mxu0 0.0
        %1951 = vmatprep.subr.mxu0 0.0
        %1952 = vmatpush1.msra.mxu0 0.0
        %1953 = vmatprep.subr.mxu0 0.0
        %1954 = vmatpush1.msra.mxu0 0.0
        %1955 = vmatprep.subr.mxu0 0.0
        %1956 = vmatpush1.msra.mxu0 0.0
        %1957 = vmatprep.subr.mxu0 0.0
        %1958 = vmatpush1.msra.mxu0 0.0
        %1959 = vmatprep.subr.mxu0 0.0
        %1960 = vmatpush1.msra.mxu0 0.0
        %1961 = vmatprep.subr.mxu0 0.0
        %1962 = vmatpush1.msra.mxu0 0.0
        %1963 = vmatprep.subr.mxu0 0.0
        %1964 = vmatpush1.msra.mxu0 0.0
        %1965 = vmatprep.subr.mxu0 0.0
        %v1966 = vand.u32 %v258, 4294901760
        %1967 = vmatpush1.msra.mxu0 %v1966
        %1968 = vmatprep.subr.mxu0 0.0
        %v1969 = vand.u32 %v257, 4294901760
        %1970 = vmatpush1.msra.mxu0 %v1969
        %1971 = vmatprep.subr.mxu0 0.0
        %1972 = vmatpush2.msra.mxu0 0.0
        %1973 = vmatprep.subr.mxu0 0.0
        %1974 = vmatpush2.msra.mxu0 0.0
        %1975 = vmatprep.subr.mxu0 0.0
        %1976 = vmatpush2.msra.mxu0 0.0
        %1977 = vmatprep.subr.mxu0 0.0
        %1978 = vmatpush2.msra.mxu0 0.0
        %1979 = vmatprep.subr.mxu0 0.0
        %1980 = vmatpush2.msra.mxu0 0.0
        %1981 = vmatprep.subr.mxu0 0.0
        %1982 = vmatpush2.msra.mxu0 0.0
        %1983 = vmatprep.subr.mxu0 0.0
        %1984 = vmatpush2.msra.mxu0 0.0
        %1985 = vmatprep.subr.mxu0 0.0
        %1986 = vmatpush2.msra.mxu0 0.0
        %1987 = vmatprep.subr.mxu0 0.0
        %1988 = vmatpush2.msra.mxu0 0.0
        %1989 = vmatprep.subr.mxu0 0.0
        %1990 = vmatpush2.msra.mxu0 0.0
        %1991 = vmatprep.subr.mxu0 0.0
        %1992 = vmatpush2.msra.mxu0 0.0
        %1993 = vmatprep.subr.mxu0 0.0
        %1994 = vmatpush2.msra.mxu0 0.0
        %1995 = vmatprep.subr.mxu0 0.0
        %1996 = vmatpush2.msra.mxu0 0.0
        %1997 = vmatprep.subr.mxu0 0.0
        %1998 = vmatpush2.msra.mxu0 0.0
        %1999 = vmatprep.subr.mxu0 0.0
        %2000 = vmatpush2.msra.mxu0 0.0
        %2001 = vmatprep.subr.mxu0 0.0
        %2002 = vmatpush2.msra.mxu0 0.0
        %2003 = vmatprep.mubr.f32.mxu0 0.0
        %v2004 = vand.u32 %v1701, 4294901760
        %v2005 = vsub.f32 %v1701, %v2004
        %v2006 = vand.u32 %v2005, 4294901760
        %2007 = vmatmul.mubr.f32.gmra.mxu0 %v2006
        %v2008 = vpop.f32.mrf.mxu0
        %v2009 = vadd.f32 %v1934, %v2008
        %v2010 = vpop.f32.mrf.mxu0
        %2011 = vdwg.mxu0
        %2012 = vmatprep.subr.mxu0 0.0
        %2013 = vmatpush1.msra.mxu0 0.0
        %2014 = vmatprep.subr.mxu0 0.0
        %2015 = vmatpush1.msra.mxu0 0.0
        %2016 = vmatprep.subr.mxu0 0.0
        %2017 = vmatpush1.msra.mxu0 0.0
        %2018 = vmatprep.subr.mxu0 0.0
        %2019 = vmatpush1.msra.mxu0 0.0
        %2020 = vmatprep.subr.mxu0 0.0
        %2021 = vmatpush1.msra.mxu0 0.0
        %2022 = vmatprep.subr.mxu0 0.0
        %2023 = vmatpush1.msra.mxu0 0.0
        %2024 = vmatprep.subr.mxu0 0.0
        %2025 = vmatpush1.msra.mxu0 0.0
        %2026 = vmatprep.subr.mxu0 0.0
        %2027 = vmatpush1.msra.mxu0 0.0
        %2028 = vmatprep.subr.mxu0 0.0
        %2029 = vmatpush1.msra.mxu0 0.0
        %2030 = vmatprep.subr.mxu0 0.0
        %2031 = vmatpush1.msra.mxu0 0.0
        %2032 = vmatprep.subr.mxu0 0.0
        %2033 = vmatpush1.msra.mxu0 0.0
        %2034 = vmatprep.subr.mxu0 0.0
        %2035 = vmatpush1.msra.mxu0 0.0
        %2036 = vmatprep.subr.mxu0 0.0
        %2037 = vmatpush1.msra.mxu0 0.0
        %2038 = vmatprep.subr.mxu0 0.0
        %2039 = vmatpush1.msra.mxu0 0.0
        %2040 = vmatprep.subr.mxu0 0.0
        %v2041 = vand.u32 %v258, 4294901760
        %v2042 = vsub.f32 %v258, %v2041
        %v2043 = vand.u32 %v2042, 4294901760
        %2044 = vmatpush1.msra.mxu0 %v2043
        %2045 = vmatprep.subr.mxu0 0.0
        %v2046 = vand.u32 %v257, 4294901760
        %v2047 = vsub.f32 %v257, %v2046
        %v2048 = vand.u32 %v2047, 4294901760
        %2049 = vmatpush1.msra.mxu0 %v2048
        %2050 = vmatprep.subr.mxu0 0.0
        %2051 = vmatpush2.msra.mxu0 0.0
        %2052 = vmatprep.subr.mxu0 0.0
        %2053 = vmatpush2.msra.mxu0 0.0
        %2054 = vmatprep.subr.mxu0 0.0
        %2055 = vmatpush2.msra.mxu0 0.0
        %2056 = vmatprep.subr.mxu0 0.0
        %2057 = vmatpush2.msra.mxu0 0.0
        %2058 = vmatprep.subr.mxu0 0.0
        %2059 = vmatpush2.msra.mxu0 0.0
        %2060 = vmatprep.subr.mxu0 0.0
        %2061 = vmatpush2.msra.mxu0 0.0
        %2062 = vmatprep.subr.mxu0 0.0
        %2063 = vmatpush2.msra.mxu0 0.0
        %2064 = vmatprep.subr.mxu0 0.0
        %2065 = vmatpush2.msra.mxu0 0.0
        %2066 = vmatprep.subr.mxu0 0.0
        %2067 = vmatpush2.msra.mxu0 0.0
        %2068 = vmatprep.subr.mxu0 0.0
        %2069 = vmatpush2.msra.mxu0 0.0
        %2070 = vmatprep.subr.mxu0 0.0
        %2071 = vmatpush2.msra.mxu0 0.0
        %2072 = vmatprep.subr.mxu0 0.0
        %2073 = vmatpush2.msra.mxu0 0.0
        %2074 = vmatprep.subr.mxu0 0.0
        %2075 = vmatpush2.msra.mxu0 0.0
        %2076 = vmatprep.subr.mxu0 0.0
        %2077 = vmatpush2.msra.mxu0 0.0
        %2078 = vmatprep.subr.mxu0 0.0
        %2079 = vmatpush2.msra.mxu0 0.0
        %2080 = vmatprep.subr.mxu0 0.0
        %2081 = vmatpush2.msra.mxu0 0.0
        %2082 = vmatprep.mubr.f32.mxu0 0.0
        %v2083 = vand.u32 %v1701, 4294901760
        %2084 = vmatmul.mubr.f32.gmra.mxu0 %v2083
        %v2085 = vpop.f32.mrf.mxu0
        %v2086 = vadd.f32 %v2009, %v2085
        %v2087 = vpop.f32.mrf.mxu0
        %2088 = vdwg.mxu0
        %2089 = vmatprep.subr.mxu0 0.0
        %2090 = vmatpush1.msra.mxu0 0.0
        %2091 = vmatprep.subr.mxu0 0.0
        %2092 = vmatpush1.msra.mxu0 0.0
        %2093 = vmatprep.subr.mxu0 0.0
        %2094 = vmatpush1.msra.mxu0 0.0
        %2095 = vmatprep.subr.mxu0 0.0
        %2096 = vmatpush1.msra.mxu0 0.0
        %2097 = vmatprep.subr.mxu0 0.0
        %2098 = vmatpush1.msra.mxu0 0.0
        %2099 = vmatprep.subr.mxu0 0.0
        %2100 = vmatpush1.msra.mxu0 0.0
        %2101 = vmatprep.subr.mxu0 0.0
        %2102 = vmatpush1.msra.mxu0 0.0
        %2103 = vmatprep.subr.mxu0 0.0
        %2104 = vmatpush1.msra.mxu0 0.0
        %2105 = vmatprep.subr.mxu0 0.0
        %2106 = vmatpush1.msra.mxu0 0.0
        %2107 = vmatprep.subr.mxu0 0.0
        %2108 = vmatpush1.msra.mxu0 0.0
        %2109 = vmatprep.subr.mxu0 0.0
        %2110 = vmatpush1.msra.mxu0 0.0
        %2111 = vmatprep.subr.mxu0 0.0
        %2112 = vmatpush1.msra.mxu0 0.0
        %2113 = vmatprep.subr.mxu0 0.0
        %2114 = vmatpush1.msra.mxu0 0.0
        %2115 = vmatprep.subr.mxu0 0.0
        %2116 = vmatpush1.msra.mxu0 0.0
        %2117 = vmatprep.subr.mxu0 0.0
        %v2118 = vand.u32 %v258, 4294901760
        %2119 = vmatpush1.msra.mxu0 %v2118
        %2120 = vmatprep.subr.mxu0 0.0
        %v2121 = vand.u32 %v257, 4294901760
        %2122 = vmatpush1.msra.mxu0 %v2121
        %2123 = vmatprep.subr.mxu0 0.0
        %2124 = vmatpush2.msra.mxu0 0.0
        %2125 = vmatprep.subr.mxu0 0.0
        %2126 = vmatpush2.msra.mxu0 0.0
        %2127 = vmatprep.subr.mxu0 0.0
        %2128 = vmatpush2.msra.mxu0 0.0
        %2129 = vmatprep.subr.mxu0 0.0
        %2130 = vmatpush2.msra.mxu0 0.0
        %2131 = vmatprep.subr.mxu0 0.0
        %2132 = vmatpush2.msra.mxu0 0.0
        %2133 = vmatprep.subr.mxu0 0.0
        %2134 = vmatpush2.msra.mxu0 0.0
        %2135 = vmatprep.subr.mxu0 0.0
        %2136 = vmatpush2.msra.mxu0 0.0
        %2137 = vmatprep.subr.mxu0 0.0
        %2138 = vmatpush2.msra.mxu0 0.0
        %2139 = vmatprep.subr.mxu0 0.0
        %2140 = vmatpush2.msra.mxu0 0.0
        %2141 = vmatprep.subr.mxu0 0.0
        %2142 = vmatpush2.msra.mxu0 0.0
        %2143 = vmatprep.subr.mxu0 0.0
        %2144 = vmatpush2.msra.mxu0 0.0
        %2145 = vmatprep.subr.mxu0 0.0
        %2146 = vmatpush2.msra.mxu0 0.0
        %2147 = vmatprep.subr.mxu0 0.0
        %2148 = vmatpush2.msra.mxu0 0.0
        %2149 = vmatprep.subr.mxu0 0.0
        %2150 = vmatpush2.msra.mxu0 0.0
        %2151 = vmatprep.subr.mxu0 0.0
        %2152 = vmatpush2.msra.mxu0 0.0
        %2153 = vmatprep.subr.mxu0 0.0
        %2154 = vmatpush2.msra.mxu0 0.0
        %2155 = vmatprep.mubr.f32.mxu0 0.0
        %v2156 = vand.u32 %v1701, 4294901760
        %2157 = vmatmul.mubr.f32.gmra.mxu0 %v2156
        %v2158 = vpop.f32.mrf.mxu0
        %v2159 = vadd.f32 %v2086, %v2158
        %v2160 = vpop.f32.mrf.mxu0
        %2161 = vdwg.mxu0
        %vm2162 = vcmask 1047584
        %2163 = vrot.lane.b32.xlu0 %v1214, 4
        %v2164 = vpop.permute.xlu0 %2163
        %v2165 = vsel %vm2162, %v2164, %v1214
        %2166 = vrot.lane.b32.xlu0 %v2165, 4
        %v2167 = vpop.permute.xlu0 %2166
        %v2168 = vsel %vm2162, %v2167, %v1214
        %2170 = vrot.lane.b32.xlu0 %v2168, 125
        %v2171 = vpop.permute.xlu0 %2170
        %v2173 = vsel %vm265, 0.0, %v2171
        %2174 = vrot.lane.b32.xlu0 %v2168, 127
        %v2175 = vpop.permute.xlu0 %2174
        %v2177 = vsel %vm266, 0.0, %v2175
        %vm2178 = vcmask 1047556
        %v2179 = vrot.slane %v1214, 4
        %v2180 = vsel %vm2178, %v2179, %v1214
        %v2181 = vrot.slane %v2180, 4
        %v2182 = vsel %vm2178, %v2181, %v1214
        %v2184 = vrot.slane %v2182, 3
        %v2186 = vsel %vm263, 0.0, %v2184
        %v2187 = vrot.slane %v2182, 1
        %v2189 = vsel %vm264, 0.0, %v2187
        %v2190 = vsub.f32 %v1214, %v2173
        %v2191 = vsub.f32 %v1214, %v2177
        %v2192 = vsub.f32 %v1214, %v2186
        %v2193 = vsub.f32 %v1214, %v2189
        %2194 = vrot.lane.b32.xlu0 %v2159, 4
        %v2195 = vpop.permute.xlu0 %2194
        %v2196 = vsel %vm2162, %v2195, %v2159
        %2197 = vrot.lane.b32.xlu0 %v2196, 4
        %v2198 = vpop.permute.xlu0 %2197
        %v2199 = vsel %vm2162, %v2198, %v2159
        %2201 = vrot.lane.b32.xlu0 %v2199, 125
        %v2202 = vpop.permute.xlu0 %2201
        %v2204 = vsel %vm265, 0.0, %v2202
        %2205 = vrot.lane.b32.xlu0 %v2199, 127
        %v2206 = vpop.permute.xlu0 %2205
        %v2208 = vsel %vm266, 0.0, %v2206
        %v2209 = vrot.slane %v2159, 4
        %v2210 = vsel %vm2178, %v2209, %v2159
        %v2211 = vrot.slane %v2210, 4
        %v2212 = vsel %vm2178, %v2211, %v2159
        %v2214 = vrot.slane %v2212, 3
        %v2216 = vsel %vm263, 0.0, %v2214
        %v2217 = vrot.slane %v2212, 1
        %v2219 = vsel %vm264, 0.0, %v2217
        %v2220 = vsub.f32 %v2159, %v2204
        %v2221 = vsub.f32 %v2159, %v2208
        %v2222 = vsub.f32 %v2159, %v2216
        %v2223 = vsub.f32 %v2159, %v2219
        %v2224 = vsub.f32 %v2190, %v2220
        %v2225 = vmul.f32 %v2224, %v2224
        %v2226 = vsub.f32 %v2191, %v2221
        %v2227 = vmul.f32 %v2226, %v2226
        %v2228 = vadd.f32 %v2225, %v2227
        %v2229 = vsub.f32 %v2192, %v2222
        %v2230 = vmul.f32 %v2229, %v2229
        %v2231 = vadd.f32 %v2228, %v2230
        %v2232 = vsub.f32 %v2193, %v2223
        %v2233 = vmul.f32 %v2232, %v2232
        %v2234 = vadd.f32 %v2231, %v2233
        %vm2235 = vcmask 27648
        %2236 = vst.msk [vmem:[%s255] sm:$0xf] %vm2235, %v2234
        %s2237 = sand.u32 %s126, 1
        %s2238 = scalar_lea.sflag [#allocation4], %s2237
        %s2239 = sand.u32 %s126, 1
        %s2240 = smul.addr %s2239, 4
        %s2241 = scalar_lea.vmem [#allocation7], %s2240
        // Predicated region
        $region45: #{tpu_custom_call.1} parent=35 // pred_check
          %p2242 = pneg %p136
        $region46: #{tpu_custom_call.1} parent=35 // pred_check_branch
          %2244 = sbr.rel (%p2242) target = $region48
        $region47: #{tpu_custom_call.1} parent=35 // pred_region
          %s2246 = ssub.s32 64, 64
          %2247 = vsyncadd %s2238, %s2246
          %s2248 = smul.addr %s24, 64
          %s2249 = scalar_lea.hbm %s4, %s2248
          %s2251 = sshll.u32 %s2241, 4
          %s2252 = int_to_ptr.vmem [resolvable:$true] %s2251
          %2254 = dma.vmem_to_hbm [thread:$0]  %s2252, 64, %s2249, %s2238
        $region48: #{tpu_custom_call.1} parent=35 // pred_fallthru
          _
      $region36: #{tpu_custom_call.1} parent=5 // pred_fallthru
        _
      %p2255 = scmp.le.s32.totalorder 2, %s19
      // Predicated region
      $region49: #{tpu_custom_call.1} parent=5 // pred_check
        %p2256 = pneg %p2255
      $region50: #{tpu_custom_call.1} parent=5 // pred_check_branch
        %2258 = sbr.rel (%p2256) target = $region52
      $region51: #{tpu_custom_call.1} parent=5 // pred_region
        %s2259 = ssub.s32 %s19, 2
        // Predicated region
        $region53: #{tpu_custom_call.1} parent=51 // pred_check
          %p2260 = pneg %p142
        $region54: #{tpu_custom_call.1} parent=51 // pred_check_branch
          %2262 = sbr.rel (%p2260) target = $region56
        $region55: #{tpu_custom_call.1} parent=51 // pred_region
          %s2263 = sand.u32 %s127, 1
          %s2264 = scalar_lea.sflag [#allocation4], %s2263
          %s2265 = sand.u32 %s127, 1
          %s2266 = smul.addr %s2265, 4
          %s2267 = scalar_lea.vmem [#allocation7], %s2266
          %2268 = dma.done %s2264, 64
        $region56: #{tpu_custom_call.1} parent=51 // pred_fallthru
          _
      $region52: #{tpu_custom_call.1} parent=5 // pred_fallthru
        _
    $region6: #{tpu_custom_call.1} parent=1 // loop_footer
      %s23 = sadd.s32 1, %s19
    $region7: #{tpu_custom_call.1} parent=1 // loop_footer_branch
      %18 = sbr.rel target = $region3
    $region8: #{tpu_custom_call.1} parent=1 // loop_exit
      _
    %2269 = vsyncpa [#allocation3], 1
    %s2270 = scalar_lea.sflag [#allocation3], 1
    %2271 = vsyncpa %s2270, 1
    %2272 = vsyncpa [#allocation6], 1
    %s2273 = scalar_lea.sflag [#allocation6], 1
    %2274 = vsyncpa %s2273, 1
    %2275 = vsyncpa [#allocation4], 1
    %s2276 = scalar_lea.sflag [#allocation4], 1
    %2277 = vsyncpa %s2276, 1

</llo_original>
